<compile_context>
chip_gen: v6e
topology: v6e:2x2x1
jax: 0.10.0
libtpu: 0.0.40
codegen_flags: <defaults>
</compile_context>

<pallas_src>
import math

import jax
import jax.numpy as jnp
from jax import lax
from jax.experimental import pallas as pl
from jax.experimental.pallas import tpu as pltpu

DP = 128          # padded channel width == vreg lane count / MXU tile width
POSE_DIM = 48     # pose_emb_size in the reference module
EDGE_DIM = 17     # edge_pred feature count


# ----------------------------------------------------------------------------
# In-kernel helpers (pure jnp, traced into the kernel body)
# ----------------------------------------------------------------------------
def _leaky_relu(x, slope=0.01):
    return jnp.where(x >= 0, x, slope * x)


def _layernorm(x, gamma, beta, n_feat, eps):
    """Single-pass LayerNorm over the lane axis of a zero-padded operand.

    `x` carries data in its first `n_feat` logical lanes and exact zeros on the
    padded lanes, so sums over all 128 lanes equal the logical statistics.
    gamma/beta are zero on padded lanes, so the output stays zero there.
    """
    inv_n = 1.0 / n_feat
    s = jnp.sum(x, axis=-1, keepdims=True)
    ss = jnp.sum(x * x, axis=-1, keepdims=True)
    mu = s * inv_n
    var = jnp.maximum(ss * inv_n - mu * mu, 0.0)
    return (x - mu) * lax.rsqrt(var + eps) * gamma + beta


# ----------------------------------------------------------------------------
# Single fused kernel: whole forward pass, all intermediates VMEM/vreg resident
# ----------------------------------------------------------------------------
def _make_kernel(B, T, C, P, D):
    f32, bf16 = jnp.float32, jnp.bfloat16
    scale = 1.0 / math.sqrt(D)
    # Static lane offsets into the packed weight slab (all multiples of 128).
    o_pw1, o_pw2, o_wq = 0 * DP, 1 * DP, 2 * DP
    o_kvx, o_kvp = 3 * DP, 5 * DP
    o_wo, o_m1, o_m2, o_dec = 7 * DP, 8 * DP, 9 * DP, 10 * DP
    R = T  # first bias/LN row inside the packed vector slab

    def kernel(x_ref, edge_ref, wmat_ref, wvec_ref, out_ref):
        vec = wvec_ref[...]                                    # [rows, 128] f32
        pos_emb = vec[0:T, :]                                  # [T, 128]
        pb1, pg1, pbe1 = vec[R:R + 1], vec[R + 1:R + 2], vec[R + 2:R + 3]
        pb2, pg2, pbe2 = vec[R + 3:R + 4], vec[R + 4:R + 5], vec[R + 5:R + 6]
        lnA_g, lnA_b = vec[R + 6:R + 7], vec[R + 7:R + 8]
        mb1, mb2 = vec[R + 8:R + 9], vec[R + 9:R + 10]
        lnB_g, lnB_b = vec[R + 10:R + 11], vec[R + 11:R + 12]
        b_dec = vec[R + 12:R + 13]

        # ---- 1. pose embedding MLP on B rows:
        #         Linear -> LN(1e-6) -> LeakyReLU -> Linear -> LN(1e-6)
        # Weights are laid out so `pose` lives in lanes C..C+P (its slot in x_p).
        edge = edge_ref[...]                                   # bf16 [B,128]
        h = jnp.dot(edge, wmat_ref[:, o_pw1:o_pw1 + DP],
                    preferred_element_type=f32) + pb1
        h = _leaky_relu(_layernorm(h, pg1, pbe1, P, 1e-6))
        h = jnp.dot(h.astype(bf16), wmat_ref[:, o_pw2:o_pw2 + DP],
                    preferred_element_type=f32) + pb2
        pose = _layernorm(h, pg2, pbe2, P, 1e-6)               # [B,128] f32

        # ---- 2. tokens + positional embedding (the channel concat with pose is
        #         never materialized: it is folded into split matmuls below).
        x = x_ref[...].astype(f32) + pos_emb[None, :, :]       # [B,T,128]
        x2 = x.reshape(B * T, DP).astype(bf16)

        # ---- 3. fused K/V projection; pose contribution added per batch.
        kv = (jnp.dot(x2, wmat_ref[:, o_kvx:o_kvx + 2 * DP],
                      preferred_element_type=f32).reshape(B, T, 2 * DP)
              + jnp.dot(pose.astype(bf16), wmat_ref[:, o_kvp:o_kvp + 2 * DP],
                        preferred_element_type=f32)[:, None, :])
        k = kv[:, :, :DP]                                      # [B,T,128]
        v = kv[:, :, DP:]                                      # [B,T,128]

        # ---- 4. only token 0 feeds the output (single-block aggregator):
        #         Q, residual, MLP, LNs and decoder run on B rows, not B*T.
        x_p0 = x[:, 0, :] + pose                 # == cat([x[:,0], pose]) padded
        q0 = jnp.dot(x_p0.astype(bf16), wmat_ref[:, o_wq:o_wq + DP],
                     preferred_element_type=f32)               # [B,128]

        logits = jnp.sum(q0[:, None, :] * k, axis=-1) * scale  # [B,T]
        m = jnp.max(logits, axis=-1, keepdims=True)
        e = jnp.exp(logits - m)
        p = e / jnp.sum(e, axis=-1, keepdims=True)             # exact softmax
        ctx0 = jnp.sum(p[:, :, None] * v, axis=1)              # [B,128]

        # ---- 5. residual + LN(1e-5) + MLP + LN(1e-5) + decoder on B rows.
        h1 = _layernorm(
            x_p0 + jnp.dot(ctx0.astype(bf16), wmat_ref[:, o_wo:o_wo + DP],
                           preferred_element_type=f32),
            lnA_g, lnA_b, D, 1e-5)
        mlp = _leaky_relu(
            jnp.dot(h1.astype(bf16), wmat_ref[:, o_m1:o_m1 + DP],
                    preferred_element_type=f32) + mb1)
        mlp = jnp.dot(mlp.astype(bf16), wmat_ref[:, o_m2:o_m2 + DP],
                      preferred_element_type=f32) + mb2
        h2 = _layernorm(h1 + mlp, lnB_g, lnB_b, D, 1e-5)

        out = jnp.dot(h2.astype(bf16), wmat_ref[:, o_dec:o_dec + DP],
                      preferred_element_type=f32) + b_dec
        out_ref[...] = out.astype(out_ref.dtype)   # lane-dense [B,128] slab

    return kernel


# ----------------------------------------------------------------------------
# Wrapper: one pallas_call, 4 lane-dense DMAs, everything resident in VMEM
# ----------------------------------------------------------------------------
def bev_forward(x_i, x_j, edge_pred, params, out_channels):
    B, S, C = x_i.shape
    T = 2 * S
    P = POSE_DIM
    D = C + P
    E = edge_pred.shape[-1]

    # Lane-dense bf16 data inputs (layout plumbing only; no wrapper upcasts).
    x = jnp.concatenate([x_i, x_j], axis=1).astype(jnp.bfloat16)   # [B,T,C]
    x_pad = jnp.pad(x, ((0, 0), (0, 0), (0, DP - C)))              # [B,T,128]
    e_pad = jnp.pad(edge_pred.astype(jnp.bfloat16), ((0, 0), (0, DP - E)))

    vmem = pl.BlockSpec(memory_space=pltpu.MemorySpace.VMEM)
    out_pad = pl.pallas_call(
        _make_kernel(B, T, C, P, D),
        out_shape=jax.ShapeDtypeStruct((B, DP), jnp.float32),
        in_specs=[vmem, vmem, vmem, vmem],
        out_specs=vmem,
        # Tiny footprint (<0.5 MiB); explicit limit keeps headroom on v7x's
        # smaller (64 MiB physical / 32 MiB scoped) VMEM when shapes scale.
        compiler_params=pltpu.CompilerParams(vmem_limit_bytes=16 * 1024 * 1024),
    )(x_pad, e_pad, params["wmat"], params["wvec"])
    return out_pad[:, :out_channels]


# ----------------------------------------------------------------------------
# Deterministic parameter init: generate torch-like weights, then pack/pad them
# into the two flat kernel buffers (done once, at init time).
# ----------------------------------------------------------------------------
def init_params(key, in_channels, out_channels, seq_len):
    C, P, E = in_channels, POSE_DIM, EDGE_DIM
    D = C + P
    H = D                        # MLP hidden width of the stand-in block
    T = 2 * seq_len
    ks = jax.random.split(key, 15)

    def unif(k, shape, fan_in):
        s = 1.0 / math.sqrt(fan_in)
        return jax.random.uniform(k, shape, jnp.float32, -s, s)

    pos_emb = 0.02 * jax.random.truncated_normal(
        ks[0], -2.0, 2.0, (T, C), jnp.float32)

    pose_w1, pose_b1 = unif(ks[1], (E, P), E), unif(ks[2], (P,), E)
    pose_w2, pose_b2 = unif(ks[3], (P, P), P), unif(ks[4], (P,), P)

    wq, wk, wv, wo = (unif(ks[i], (D, D), D) for i in (5, 6, 7, 8))
    mlp_w1, mlp_b1 = unif(ks[9], (D, H), D), unif(ks[10], (H,), D)
    mlp_w2, mlp_b2 = unif(ks[11], (H, D), H), unif(ks[12], (D,), H)
    w_dec, b_dec = unif(ks[13], (D, out_channels), D), unif(ks[14], (out_channels,), D)

    ones = lambda n: jnp.ones((n,), jnp.float32)
    zeros = lambda n: jnp.zeros((n,), jnp.float32)

    # ---- packed matrix slab [128, 11*128] bf16 : one DMA for every matmul weight
    def slab(width, *placements):
        out = jnp.zeros((DP, width), jnp.float32)
        for r, c, m in placements:
            out = out.at[r:r + m.shape[0], c:c + m.shape[1]].set(m)
        return out

    wmat = jnp.concatenate([
        slab(DP, (0, C, pose_w1)),                      # lanes    0: edge -> pose hidden (out lanes C..C+P)
        slab(DP, (C, C, pose_w2)),                      # lanes  128: pose hidden -> pose (lanes C..C+P)
        slab(DP, (0, 0, wq)),                           # lanes  256: Wq (full DxD)
        slab(2 * DP, (0, 0, wk[:C]), (0, DP, wv[:C])),  # lanes  384: fused [Wk|Wv], x-rows
        slab(2 * DP, (C, 0, wk[C:]), (C, DP, wv[C:])),  # lanes  640: fused [Wk|Wv], pose-rows
        slab(DP, (0, 0, wo)),                           # lanes  896: Wo
        slab(DP, (0, 0, mlp_w1)),                       # lanes 1024: MLP in
        slab(DP, (0, 0, mlp_w2)),                       # lanes 1152: MLP out
        slab(DP, (0, 0, w_dec)),                        # lanes 1280: decoder
    ], axis=1).astype(jnp.bfloat16)

    # ---- packed vector slab [T+13 -> mult-of-8, 128] f32 : pos-emb + biases + LN params
    def row(v, off=0):
        return jnp.zeros((1, DP), jnp.float32).at[0, off:off + v.shape[0]].set(v)

    wvec = jnp.concatenate(
        [jnp.pad(pos_emb, ((0, 0), (0, DP - C)))] +                 # rows 0..T
        [row(pose_b1, C), row(ones(P), C), row(zeros(P), C),        # pose LN1
         row(pose_b2, C), row(ones(P), C), row(zeros(P), C),        # pose LN2
         row(ones(D)), row(zeros(D)),                               # aggregator LN-A
         row(mlp_b1), row(mlp_b2),
         row(ones(D)), row(zeros(D)),                               # aggregator LN-B
         row(b_dec)], axis=0)
    wvec = jnp.pad(wvec, ((0, (-wvec.shape[0]) % 8), (0, 0)))

    return dict(wmat=wmat, wvec=wvec)


# ----------------------------------------------------------------------------
if __name__ == "__main__":
    B = 2
    IN_CHANNELS = 16
    SEQ_LEN = 8            # tokens per agent -> 2*SEQ_LEN = 16 tokens total
    OUT_CHANNELS = 32

    key = jax.random.PRNGKey(0)
    k_xi, k_xj, k_e, k_p = jax.random.split(key, 4)

    x_i = jax.random.normal(k_xi, (B, SEQ_LEN, IN_CHANNELS), jnp.float32)
    x_j = jax.random.normal(k_xj, (B, SEQ_LEN, IN_CHANNELS), jnp.float32)
    edge_pred = jax.random.normal(k_e, (B, EDGE_DIM), jnp.float32)
    params = init_params(k_p, IN_CHANNELS, OUT_CHANNELS, SEQ_LEN)

    fwd = jax.jit(bev_forward, static_argnames=("out_channels",))
    out = jax.block_until_ready(
        fwd(x_i, x_j, edge_pred, params, out_channels=OUT_CHANNELS))

    assert out.shape == (B, OUT_CHANNELS), out.shape
    assert bool(jnp.all(jnp.isfinite(out)))
    print("KERNEL_OK")
</pallas_src>

<mosaic_0001>
module attributes {stable_mosaic.version = 11 : i64} {
  func.func @kernel(%arg0: memref<2x16x128xbf16, #tpu.memory_space<vmem>>, %arg1: memref<2x128xbf16, #tpu.memory_space<vmem>>, %arg2: memref<128x1408xbf16, #tpu.memory_space<vmem>>, %arg3: memref<32x128xf32, #tpu.memory_space<vmem>>, %arg4: memref<2x128xf32, #tpu.memory_space<vmem>>) attributes {dimension_semantics = [], scalar_prefetch = 0 : i64, scratch_operands = 0 : i64, tpu.core_type = #tpu.core_type<tc>} {
    %c0 = arith.constant 0 : index
    %c0_0 = arith.constant 0 : index
    %0 = vector.load %arg3[%c0, %c0_0] : memref<32x128xf32, #tpu.memory_space<vmem>>, vector<32x128xf32>
    %1 = vector.extract_strided_slice %0 {offsets = [0, 0], sizes = [16, 128], strides = [1, 1]} : vector<32x128xf32> to vector<16x128xf32>
    %2 = vector.extract_strided_slice %0 {offsets = [16, 0], sizes = [1, 128], strides = [1, 1]} : vector<32x128xf32> to vector<1x128xf32>
    %3 = vector.extract_strided_slice %0 {offsets = [17, 0], sizes = [1, 128], strides = [1, 1]} : vector<32x128xf32> to vector<1x128xf32>
    %4 = vector.extract_strided_slice %0 {offsets = [18, 0], sizes = [1, 128], strides = [1, 1]} : vector<32x128xf32> to vector<1x128xf32>
    %5 = vector.extract_strided_slice %0 {offsets = [19, 0], sizes = [1, 128], strides = [1, 1]} : vector<32x128xf32> to vector<1x128xf32>
    %6 = vector.extract_strided_slice %0 {offsets = [20, 0], sizes = [1, 128], strides = [1, 1]} : vector<32x128xf32> to vector<1x128xf32>
    %7 = vector.extract_strided_slice %0 {offsets = [21, 0], sizes = [1, 128], strides = [1, 1]} : vector<32x128xf32> to vector<1x128xf32>
    %8 = vector.extract_strided_slice %0 {offsets = [22, 0], sizes = [1, 128], strides = [1, 1]} : vector<32x128xf32> to vector<1x128xf32>
    %9 = vector.extract_strided_slice %0 {offsets = [23, 0], sizes = [1, 128], strides = [1, 1]} : vector<32x128xf32> to vector<1x128xf32>
    %10 = vector.extract_strided_slice %0 {offsets = [24, 0], sizes = [1, 128], strides = [1, 1]} : vector<32x128xf32> to vector<1x128xf32>
    %11 = vector.extract_strided_slice %0 {offsets = [25, 0], sizes = [1, 128], strides = [1, 1]} : vector<32x128xf32> to vector<1x128xf32>
    %12 = vector.extract_strided_slice %0 {offsets = [26, 0], sizes = [1, 128], strides = [1, 1]} : vector<32x128xf32> to vector<1x128xf32>
    %13 = vector.extract_strided_slice %0 {offsets = [27, 0], sizes = [1, 128], strides = [1, 1]} : vector<32x128xf32> to vector<1x128xf32>
    %14 = vector.extract_strided_slice %0 {offsets = [28, 0], sizes = [1, 128], strides = [1, 1]} : vector<32x128xf32> to vector<1x128xf32>
    %c0_1 = arith.constant 0 : index
    %c0_2 = arith.constant 0 : index
    %15 = vector.load %arg1[%c0_1, %c0_2] : memref<2x128xbf16, #tpu.memory_space<vmem>>, vector<2x128xbf16>
    %c0_3 = arith.constant 0 : index
    %c0_4 = arith.constant 0 : index
    %16 = vector.load %arg2[%c0_3, %c0_4] : memref<128x1408xbf16, #tpu.memory_space<vmem>>, vector<128x128xbf16>
    %cst = arith.constant dense<0.000000e+00> : vector<2x128xf32>
    %17 = tpu.matmul %15, %16, %cst {dimension_numbers = #tpu.dot_dimension_numbers<[1], [0], [0], [1], [0, 0, 1, 1], [], []>} : vector<2x128xbf16>, vector<128x128xbf16>, vector<2x128xf32> -> vector<2x128xf32>
    %18 = vector.broadcast %2 : vector<1x128xf32> to vector<2x128xf32>
    %19 = arith.addf %17, %18 : vector<2x128xf32>
    %cst_5 = arith.constant dense<0.000000e+00> : vector<2xf32>
    %20 = vector.multi_reduction <add>, %19, %cst_5 [1] : vector<2x128xf32> to vector<2xf32>
    %21 = vector.shape_cast %20 : vector<2xf32> to vector<2x1xf32>
    %22 = arith.mulf %19, %19 : vector<2x128xf32>
    %cst_6 = arith.constant dense<0.000000e+00> : vector<2xf32>
    %23 = vector.multi_reduction <add>, %22, %cst_6 [1] : vector<2x128xf32> to vector<2xf32>
    %24 = vector.shape_cast %23 : vector<2xf32> to vector<2x1xf32>
    %cst_7 = arith.constant 0.020833334 : f32
    %25 = vector.broadcast %cst_7 : f32 to vector<2x1xf32>
    %26 = arith.mulf %21, %25 : vector<2x1xf32>
    %cst_8 = arith.constant 0.020833334 : f32
    %27 = vector.broadcast %cst_8 : f32 to vector<2x1xf32>
    %28 = arith.mulf %24, %27 : vector<2x1xf32>
    %29 = arith.mulf %26, %26 : vector<2x1xf32>
    %30 = arith.subf %28, %29 : vector<2x1xf32>
    %cst_9 = arith.constant 0.000000e+00 : f32
    %31 = vector.broadcast %cst_9 : f32 to vector<2x1xf32>
    %32 = arith.maximumf %30, %31 : vector<2x1xf32>
    %33 = vector.broadcast %26 : vector<2x1xf32> to vector<2x128xf32>
    %34 = arith.subf %19, %33 : vector<2x128xf32>
    %cst_10 = arith.constant 9.99999997E-7 : f32
    %35 = vector.broadcast %cst_10 : f32 to vector<2x1xf32>
    %36 = arith.addf %32, %35 : vector<2x1xf32>
    %37 = math.rsqrt %36 : vector<2x1xf32>
    %38 = vector.broadcast %37 : vector<2x1xf32> to vector<2x128xf32>
    %39 = arith.mulf %34, %38 : vector<2x128xf32>
    %40 = vector.broadcast %3 : vector<1x128xf32> to vector<2x128xf32>
    %41 = arith.mulf %39, %40 : vector<2x128xf32>
    %42 = vector.broadcast %4 : vector<1x128xf32> to vector<2x128xf32>
    %43 = arith.addf %41, %42 : vector<2x128xf32>
    %cst_11 = arith.constant 0.000000e+00 : f32
    %44 = vector.broadcast %cst_11 : f32 to vector<2x128xf32>
    %45 = arith.cmpf oge, %43, %44 : vector<2x128xf32>
    %cst_12 = arith.constant 0.00999999977 : f32
    %46 = vector.broadcast %cst_12 : f32 to vector<2x128xf32>
    %47 = arith.mulf %46, %43 : vector<2x128xf32>
    %48 = arith.select %45, %43, %47 : vector<2x128xi1>, vector<2x128xf32>
    %49 = arith.truncf %48 : vector<2x128xf32> to vector<2x128xbf16>
    %c0_13 = arith.constant 0 : index
    %c128 = arith.constant 128 : index
    %50 = vector.load %arg2[%c0_13, %c128] : memref<128x1408xbf16, #tpu.memory_space<vmem>>, vector<128x128xbf16>
    %cst_14 = arith.constant dense<0.000000e+00> : vector<2x128xf32>
    %51 = tpu.matmul %49, %50, %cst_14 {dimension_numbers = #tpu.dot_dimension_numbers<[1], [0], [0], [1], [0, 0, 1, 1], [], []>} : vector<2x128xbf16>, vector<128x128xbf16>, vector<2x128xf32> -> vector<2x128xf32>
    %52 = vector.broadcast %5 : vector<1x128xf32> to vector<2x128xf32>
    %53 = arith.addf %51, %52 : vector<2x128xf32>
    %cst_15 = arith.constant dense<0.000000e+00> : vector<2xf32>
    %54 = vector.multi_reduction <add>, %53, %cst_15 [1] : vector<2x128xf32> to vector<2xf32>
    %55 = vector.shape_cast %54 : vector<2xf32> to vector<2x1xf32>
    %56 = arith.mulf %53, %53 : vector<2x128xf32>
    %cst_16 = arith.constant dense<0.000000e+00> : vector<2xf32>
    %57 = vector.multi_reduction <add>, %56, %cst_16 [1] : vector<2x128xf32> to vector<2xf32>
    %58 = vector.shape_cast %57 : vector<2xf32> to vector<2x1xf32>
    %cst_17 = arith.constant 0.020833334 : f32
    %59 = vector.broadcast %cst_17 : f32 to vector<2x1xf32>
    %60 = arith.mulf %55, %59 : vector<2x1xf32>
    %cst_18 = arith.constant 0.020833334 : f32
    %61 = vector.broadcast %cst_18 : f32 to vector<2x1xf32>
    %62 = arith.mulf %58, %61 : vector<2x1xf32>
    %63 = arith.mulf %60, %60 : vector<2x1xf32>
    %64 = arith.subf %62, %63 : vector<2x1xf32>
    %cst_19 = arith.constant 0.000000e+00 : f32
    %65 = vector.broadcast %cst_19 : f32 to vector<2x1xf32>
    %66 = arith.maximumf %64, %65 : vector<2x1xf32>
    %67 = vector.broadcast %60 : vector<2x1xf32> to vector<2x128xf32>
    %68 = arith.subf %53, %67 : vector<2x128xf32>
    %cst_20 = arith.constant 9.99999997E-7 : f32
    %69 = vector.broadcast %cst_20 : f32 to vector<2x1xf32>
    %70 = arith.addf %66, %69 : vector<2x1xf32>
    %71 = math.rsqrt %70 : vector<2x1xf32>
    %72 = vector.broadcast %71 : vector<2x1xf32> to vector<2x128xf32>
    %73 = arith.mulf %68, %72 : vector<2x128xf32>
    %74 = vector.broadcast %6 : vector<1x128xf32> to vector<2x128xf32>
    %75 = arith.mulf %73, %74 : vector<2x128xf32>
    %76 = vector.broadcast %7 : vector<1x128xf32> to vector<2x128xf32>
    %77 = arith.addf %75, %76 : vector<2x128xf32>
    %c0_21 = arith.constant 0 : index
    %c0_22 = arith.constant 0 : index
    %c0_23 = arith.constant 0 : index
    %78 = vector.load %arg0[%c0_21, %c0_22, %c0_23] : memref<2x16x128xbf16, #tpu.memory_space<vmem>>, vector<2x16x128xbf16>
    %79 = arith.extf %78 : vector<2x16x128xbf16> to vector<2x16x128xf32>
    %80 = vector.shape_cast %1 : vector<16x128xf32> to vector<1x16x128xf32>
    %81 = vector.broadcast %80 : vector<1x16x128xf32> to vector<2x16x128xf32>
    %82 = arith.addf %79, %81 : vector<2x16x128xf32>
    %83 = vector.shape_cast %82 : vector<2x16x128xf32> to vector<32x128xf32>
    %84 = arith.truncf %83 : vector<32x128xf32> to vector<32x128xbf16>
    %c0_24 = arith.constant 0 : index
    %c384 = arith.constant 384 : index
    %85 = vector.load %arg2[%c0_24, %c384] : memref<128x1408xbf16, #tpu.memory_space<vmem>>, vector<128x256xbf16>
    %cst_25 = arith.constant dense<0.000000e+00> : vector<32x256xf32>
    %86 = tpu.matmul %84, %85, %cst_25 {dimension_numbers = #tpu.dot_dimension_numbers<[1], [0], [0], [1], [0, 0, 1, 1], [], []>} : vector<32x128xbf16>, vector<128x256xbf16>, vector<32x256xf32> -> vector<32x256xf32>
    %87 = vector.shape_cast %86 : vector<32x256xf32> to vector<2x16x256xf32>
    %88 = arith.truncf %77 : vector<2x128xf32> to vector<2x128xbf16>
    %c0_26 = arith.constant 0 : index
    %c640 = arith.constant 640 : index
    %89 = vector.load %arg2[%c0_26, %c640] : memref<128x1408xbf16, #tpu.memory_space<vmem>>, vector<128x256xbf16>
    %cst_27 = arith.constant dense<0.000000e+00> : vector<2x256xf32>
    %90 = tpu.matmul %88, %89, %cst_27 {dimension_numbers = #tpu.dot_dimension_numbers<[1], [0], [0], [1], [0, 0, 1, 1], [], []>} : vector<2x128xbf16>, vector<128x256xbf16>, vector<2x256xf32> -> vector<2x256xf32>
    %91 = vector.shape_cast %90 : vector<2x256xf32> to vector<2x1x256xf32>
    %92 = vector.broadcast %91 : vector<2x1x256xf32> to vector<2x16x256xf32>
    %93 = arith.addf %87, %92 : vector<2x16x256xf32>
    %94 = vector.extract_strided_slice %93 {offsets = [0, 0, 0], sizes = [2, 16, 128], strides = [1, 1, 1]} : vector<2x16x256xf32> to vector<2x16x128xf32>
    %95 = vector.extract_strided_slice %93 {offsets = [0, 0, 128], sizes = [2, 16, 128], strides = [1, 1, 1]} : vector<2x16x256xf32> to vector<2x16x128xf32>
    %96 = vector.extract_strided_slice %82 {offsets = [0, 0, 0], sizes = [2, 1, 128], strides = [1, 1, 1]} : vector<2x16x128xf32> to vector<2x1x128xf32>
    %97 = vector.shape_cast %96 : vector<2x1x128xf32> to vector<2x128xf32>
    %98 = arith.addf %97, %77 : vector<2x128xf32>
    %99 = arith.truncf %98 : vector<2x128xf32> to vector<2x128xbf16>
    %c0_28 = arith.constant 0 : index
    %c256 = arith.constant 256 : index
    %100 = vector.load %arg2[%c0_28, %c256] : memref<128x1408xbf16, #tpu.memory_space<vmem>>, vector<128x128xbf16>
    %cst_29 = arith.constant dense<0.000000e+00> : vector<2x128xf32>
    %101 = tpu.matmul %99, %100, %cst_29 {dimension_numbers = #tpu.dot_dimension_numbers<[1], [0], [0], [1], [0, 0, 1, 1], [], []>} : vector<2x128xbf16>, vector<128x128xbf16>, vector<2x128xf32> -> vector<2x128xf32>
    %102 = vector.shape_cast %101 : vector<2x128xf32> to vector<2x1x128xf32>
    %103 = vector.broadcast %102 : vector<2x1x128xf32> to vector<2x16x128xf32>
    %104 = arith.mulf %103, %94 : vector<2x16x128xf32>
    %cst_30 = arith.constant dense<0.000000e+00> : vector<2x16xf32>
    %105 = vector.multi_reduction <add>, %104, %cst_30 [2] : vector<2x16x128xf32> to vector<2x16xf32>
    %cst_31 = arith.constant 1.250000e-01 : f32
    %106 = vector.broadcast %cst_31 : f32 to vector<2x16xf32>
    %107 = arith.mulf %105, %106 : vector<2x16xf32>
    %cst_32 = arith.constant dense<0xFF800000> : vector<2xf32>
    %108 = vector.multi_reduction <maximumf>, %107, %cst_32 [1] : vector<2x16xf32> to vector<2xf32>
    %109 = vector.shape_cast %108 : vector<2xf32> to vector<2x1xf32>
    %110 = vector.broadcast %109 : vector<2x1xf32> to vector<2x16xf32>
    %111 = arith.subf %107, %110 : vector<2x16xf32>
    %112 = math.exp %111 : vector<2x16xf32>
    %cst_33 = arith.constant dense<0.000000e+00> : vector<2xf32>
    %113 = vector.multi_reduction <add>, %112, %cst_33 [1] : vector<2x16xf32> to vector<2xf32>
    %114 = vector.shape_cast %113 : vector<2xf32> to vector<2x1xf32>
    %115 = vector.broadcast %114 : vector<2x1xf32> to vector<2x16xf32>
    %116 = arith.divf %112, %115 : vector<2x16xf32>
    %117 = vector.shape_cast %116 : vector<2x16xf32> to vector<2x16x1xf32>
    %118 = vector.broadcast %117 : vector<2x16x1xf32> to vector<2x16x128xf32>
    %119 = arith.mulf %118, %95 : vector<2x16x128xf32>
    %cst_34 = arith.constant dense<0.000000e+00> : vector<2x128xf32>
    %120 = vector.multi_reduction <add>, %119, %cst_34 [1] : vector<2x16x128xf32> to vector<2x128xf32>
    %121 = arith.truncf %120 : vector<2x128xf32> to vector<2x128xbf16>
    %c0_35 = arith.constant 0 : index
    %c896 = arith.constant 896 : index
    %122 = vector.load %arg2[%c0_35, %c896] : memref<128x1408xbf16, #tpu.memory_space<vmem>>, vector<128x128xbf16>
    %cst_36 = arith.constant dense<0.000000e+00> : vector<2x128xf32>
    %123 = tpu.matmul %121, %122, %cst_36 {dimension_numbers = #tpu.dot_dimension_numbers<[1], [0], [0], [1], [0, 0, 1, 1], [], []>} : vector<2x128xbf16>, vector<128x128xbf16>, vector<2x128xf32> -> vector<2x128xf32>
    %124 = arith.addf %98, %123 : vector<2x128xf32>
    %cst_37 = arith.constant dense<0.000000e+00> : vector<2xf32>
    %125 = vector.multi_reduction <add>, %124, %cst_37 [1] : vector<2x128xf32> to vector<2xf32>
    %126 = vector.shape_cast %125 : vector<2xf32> to vector<2x1xf32>
    %127 = arith.mulf %124, %124 : vector<2x128xf32>
    %cst_38 = arith.constant dense<0.000000e+00> : vector<2xf32>
    %128 = vector.multi_reduction <add>, %127, %cst_38 [1] : vector<2x128xf32> to vector<2xf32>
    %129 = vector.shape_cast %128 : vector<2xf32> to vector<2x1xf32>
    %cst_39 = arith.constant 1.562500e-02 : f32
    %130 = vector.broadcast %cst_39 : f32 to vector<2x1xf32>
    %131 = arith.mulf %126, %130 : vector<2x1xf32>
    %cst_40 = arith.constant 1.562500e-02 : f32
    %132 = vector.broadcast %cst_40 : f32 to vector<2x1xf32>
    %133 = arith.mulf %129, %132 : vector<2x1xf32>
    %134 = arith.mulf %131, %131 : vector<2x1xf32>
    %135 = arith.subf %133, %134 : vector<2x1xf32>
    %cst_41 = arith.constant 0.000000e+00 : f32
    %136 = vector.broadcast %cst_41 : f32 to vector<2x1xf32>
    %137 = arith.maximumf %135, %136 : vector<2x1xf32>
    %138 = vector.broadcast %131 : vector<2x1xf32> to vector<2x128xf32>
    %139 = arith.subf %124, %138 : vector<2x128xf32>
    %cst_42 = arith.constant 9.99999974E-6 : f32
    %140 = vector.broadcast %cst_42 : f32 to vector<2x1xf32>
    %141 = arith.addf %137, %140 : vector<2x1xf32>
    %142 = math.rsqrt %141 : vector<2x1xf32>
    %143 = vector.broadcast %142 : vector<2x1xf32> to vector<2x128xf32>
    %144 = arith.mulf %139, %143 : vector<2x128xf32>
    %145 = vector.broadcast %8 : vector<1x128xf32> to vector<2x128xf32>
    %146 = arith.mulf %144, %145 : vector<2x128xf32>
    %147 = vector.broadcast %9 : vector<1x128xf32> to vector<2x128xf32>
    %148 = arith.addf %146, %147 : vector<2x128xf32>
    %149 = arith.truncf %148 : vector<2x128xf32> to vector<2x128xbf16>
    %c0_43 = arith.constant 0 : index
    %c1024 = arith.constant 1024 : index
    %150 = vector.load %arg2[%c0_43, %c1024] : memref<128x1408xbf16, #tpu.memory_space<vmem>>, vector<128x128xbf16>
    %cst_44 = arith.constant dense<0.000000e+00> : vector<2x128xf32>
    %151 = tpu.matmul %149, %150, %cst_44 {dimension_numbers = #tpu.dot_dimension_numbers<[1], [0], [0], [1], [0, 0, 1, 1], [], []>} : vector<2x128xbf16>, vector<128x128xbf16>, vector<2x128xf32> -> vector<2x128xf32>
    %152 = vector.broadcast %10 : vector<1x128xf32> to vector<2x128xf32>
    %153 = arith.addf %151, %152 : vector<2x128xf32>
    %cst_45 = arith.constant 0.000000e+00 : f32
    %154 = vector.broadcast %cst_45 : f32 to vector<2x128xf32>
    %155 = arith.cmpf oge, %153, %154 : vector<2x128xf32>
    %cst_46 = arith.constant 0.00999999977 : f32
    %156 = vector.broadcast %cst_46 : f32 to vector<2x128xf32>
    %157 = arith.mulf %156, %153 : vector<2x128xf32>
    %158 = arith.select %155, %153, %157 : vector<2x128xi1>, vector<2x128xf32>
    %159 = arith.truncf %158 : vector<2x128xf32> to vector<2x128xbf16>
    %c0_47 = arith.constant 0 : index
    %c1152 = arith.constant 1152 : index
    %160 = vector.load %arg2[%c0_47, %c1152] : memref<128x1408xbf16, #tpu.memory_space<vmem>>, vector<128x128xbf16>
    %cst_48 = arith.constant dense<0.000000e+00> : vector<2x128xf32>
    %161 = tpu.matmul %159, %160, %cst_48 {dimension_numbers = #tpu.dot_dimension_numbers<[1], [0], [0], [1], [0, 0, 1, 1], [], []>} : vector<2x128xbf16>, vector<128x128xbf16>, vector<2x128xf32> -> vector<2x128xf32>
    %162 = vector.broadcast %11 : vector<1x128xf32> to vector<2x128xf32>
    %163 = arith.addf %161, %162 : vector<2x128xf32>
    %164 = arith.addf %148, %163 : vector<2x128xf32>
    %cst_49 = arith.constant dense<0.000000e+00> : vector<2xf32>
    %165 = vector.multi_reduction <add>, %164, %cst_49 [1] : vector<2x128xf32> to vector<2xf32>
    %166 = vector.shape_cast %165 : vector<2xf32> to vector<2x1xf32>
    %167 = arith.mulf %164, %164 : vector<2x128xf32>
    %cst_50 = arith.constant dense<0.000000e+00> : vector<2xf32>
    %168 = vector.multi_reduction <add>, %167, %cst_50 [1] : vector<2x128xf32> to vector<2xf32>
    %169 = vector.shape_cast %168 : vector<2xf32> to vector<2x1xf32>
    %cst_51 = arith.constant 1.562500e-02 : f32
    %170 = vector.broadcast %cst_51 : f32 to vector<2x1xf32>
    %171 = arith.mulf %166, %170 : vector<2x1xf32>
    %cst_52 = arith.constant 1.562500e-02 : f32
    %172 = vector.broadcast %cst_52 : f32 to vector<2x1xf32>
    %173 = arith.mulf %169, %172 : vector<2x1xf32>
    %174 = arith.mulf %171, %171 : vector<2x1xf32>
    %175 = arith.subf %173, %174 : vector<2x1xf32>
    %cst_53 = arith.constant 0.000000e+00 : f32
    %176 = vector.broadcast %cst_53 : f32 to vector<2x1xf32>
    %177 = arith.maximumf %175, %176 : vector<2x1xf32>
    %178 = vector.broadcast %171 : vector<2x1xf32> to vector<2x128xf32>
    %179 = arith.subf %164, %178 : vector<2x128xf32>
    %cst_54 = arith.constant 9.99999974E-6 : f32
    %180 = vector.broadcast %cst_54 : f32 to vector<2x1xf32>
    %181 = arith.addf %177, %180 : vector<2x1xf32>
    %182 = math.rsqrt %181 : vector<2x1xf32>
    %183 = vector.broadcast %182 : vector<2x1xf32> to vector<2x128xf32>
    %184 = arith.mulf %179, %183 : vector<2x128xf32>
    %185 = vector.broadcast %12 : vector<1x128xf32> to vector<2x128xf32>
    %186 = arith.mulf %184, %185 : vector<2x128xf32>
    %187 = vector.broadcast %13 : vector<1x128xf32> to vector<2x128xf32>
    %188 = arith.addf %186, %187 : vector<2x128xf32>
    %189 = arith.truncf %188 : vector<2x128xf32> to vector<2x128xbf16>
    %c0_55 = arith.constant 0 : index
    %c1280 = arith.constant 1280 : index
    %190 = vector.load %arg2[%c0_55, %c1280] : memref<128x1408xbf16, #tpu.memory_space<vmem>>, vector<128x128xbf16>
    %cst_56 = arith.constant dense<0.000000e+00> : vector<2x128xf32>
    %191 = tpu.matmul %189, %190, %cst_56 {dimension_numbers = #tpu.dot_dimension_numbers<[1], [0], [0], [1], [0, 0, 1, 1], [], []>} : vector<2x128xbf16>, vector<128x128xbf16>, vector<2x128xf32> -> vector<2x128xf32>
    %192 = vector.broadcast %14 : vector<1x128xf32> to vector<2x128xf32>
    %193 = arith.addf %191, %192 : vector<2x128xf32>
    %c0_57 = arith.constant 0 : index
    %c0_58 = arith.constant 0 : index
    %194 = vector.load %arg4[%c0_57, %c0_58] : memref<2x128xf32, #tpu.memory_space<vmem>>, vector<2x128xf32>
    tpu.vector_store %arg4[%c0_57, %c0_58], %193 {strides = array<i32>} : memref<2x128xf32, #tpu.memory_space<vmem>>, vector<2x128xf32>,
    return
  }
}

</mosaic_0001>

<llo_original>
// kernel: bev_forward.1
$region0: #{bev_forward.1}
  #allocation0 [shape = 'u32[]', space=smem, size = 0x4, offset = 0x4, fixed_abs, tag = 'smem constant byte address 0x4 - core index']
  #allocation1 [shape = 'u32[144,128]{1,0:T(1,128)}', space=vmem, size = 0x12000, scoped, tag = 'internal scratch']
  %s0 = inlined_call_operand.vmem [shape: bf16[2,16,128], index: 0, kind: input, shape index: {}]
  %s1 = inlined_call_operand.vmem [shape: bf16[2,128], index: 1, kind: input, shape index: {}]
  %s2 = inlined_call_operand.hbm [shape: bf16[128,1408], index: 2, kind: input, shape index: {}]
  %s3 = inlined_call_operand.vmem [shape: f32[32,128], index: 3, kind: input, shape index: {}]
  %s4 = inlined_call_operand.hbm [shape: f32[2,128], index: 4, kind: output, shape index: {}]
  %s5 = sld [smem:[#allocation0]]
  $region30: #{bev_forward.1} parent=0
    _
  %s7 = ssub.s32 1, %s5
  %s8 = scalar_select 0, %s7, %s5
  $region1: #{bev_forward.1} parent=0
    #allocation2 [shape = 'u8[360448]{0}', space=vmem, size = 0x58000, scoped, tag = 'input window, operand 2, single buffered']
    #allocation3 [shape = 's32[1]{0}', space=sflag, size = 0x4, scoped, tag = 'scoped memory for bev_forward.1']
    #allocation4 [shape = 's32[1]{0}', space=sflag, size = 0x4, scoped, tag = 'scoped memory for bev_forward.1']
    #allocation5 [shape = 'u8[1024]{0}', space=vmem, size = 0x400, scoped, tag = 'output window, operand 0, single buffered']
    %9 = vsyncpa [#allocation3], 0
    %10 = vsyncpa [#allocation4], 0
    // Predicated region
    $region2: #{bev_forward.1} parent=1 // pred_check
      _
    $region3: #{bev_forward.1} parent=1 // pred_check_branch
      %12 = sbr.rel (0) target = $region5
    $region4: #{bev_forward.1} parent=1 // pred_region
      _
    $region5: #{bev_forward.1} parent=1 // pred_fallthru
      _
    // Predicated region
    $region6: #{bev_forward.1} parent=1 // pred_check
      _
    $region7: #{bev_forward.1} parent=1 // pred_check_branch
      %14 = sbr.rel (0) target = $region9
    $region8: #{bev_forward.1} parent=1 // pred_region
      _
    $region9: #{bev_forward.1} parent=1 // pred_fallthru
      _
    // Predicated region
    $region10: #{bev_forward.1} parent=1 // pred_check
      _
    $region11: #{bev_forward.1} parent=1 // pred_check_branch
      %16 = sbr.rel (0) target = $region13
    $region12: #{bev_forward.1} parent=1 // pred_region
      %s18 = ssub.s32 11264, 11264
      %19 = vsyncadd [#allocation3], %s18
      %s20 = sshll.u32 [#allocation2], 4
      %s21 = int_to_ptr.vmem [resolvable:$true] %s20
      %26 = dma.hbm_to_vmem [thread:$0]  %s2, 11264, %s21, [#allocation3], 704, 704, 44
    $region13: #{bev_forward.1} parent=1 // pred_fallthru
      _
    // Predicated region
    $region14: #{bev_forward.1} parent=1 // pred_check
      _
    $region15: #{bev_forward.1} parent=1 // pred_check_branch
      %28 = sbr.rel (0) target = $region17
    $region16: #{bev_forward.1} parent=1 // pred_region
      _
    $region17: #{bev_forward.1} parent=1 // pred_fallthru
      _
    // Predicated region
    $region18: #{bev_forward.1} parent=1 // pred_check
      _
    $region19: #{bev_forward.1} parent=1 // pred_check_branch
      %30 = sbr.rel (0) target = $region21
    $region20: #{bev_forward.1} parent=1 // pred_region
      %31 = dma.done [#allocation3], 11264
    $region21: #{bev_forward.1} parent=1 // pred_fallthru
      _
    %v33 = vld [vmem:[%s3] sm:$0xff]
    %v34 = vld [vmem:[%s3 + $0x8] sm:$0xff]
    %v35 = vld [vmem:[%s3 + $0x10] sm:$0xff]
    %v36 = vld [vmem:[%s3 + $0x18] sm:$0xff]
    %v37 = vld [vmem:[%s1] sm:$0x1]
    %v38 = vld [vmem:[#allocation2] sm:$0xf]
    %v39 = vld [vmem:[#allocation2 + $0x2c] sm:$0xf]
    %v40 = vld [vmem:[#allocation2 + $0x58] sm:$0xf]
    %v41 = vld [vmem:[#allocation2 + $0x84] sm:$0xf]
    %v42 = vld [vmem:[#allocation2 + $0xb0] sm:$0xf]
    %v43 = vld [vmem:[#allocation2 + $0xdc] sm:$0xf]
    %v44 = vld [vmem:[#allocation2 + $0x108] sm:$0xf]
    %v45 = vld [vmem:[#allocation2 + $0x134] sm:$0xf]
    %v46 = vld [vmem:[#allocation2 + $0x160] sm:$0xf]
    %v47 = vld [vmem:[#allocation2 + $0x18c] sm:$0xf]
    %v48 = vld [vmem:[#allocation2 + $0x1b8] sm:$0xf]
    %v49 = vld [vmem:[#allocation2 + $0x1e4] sm:$0xf]
    %v50 = vld [vmem:[#allocation2 + $0x210] sm:$0xf]
    %v51 = vld [vmem:[#allocation2 + $0x23c] sm:$0xf]
    %v52 = vld [vmem:[#allocation2 + $0x268] sm:$0xf]
    %v53 = vld [vmem:[#allocation2 + $0x294] sm:$0xf]
    %v54 = vlaneseq
    %v55 = vshrl.u32 %v54, 7
    %v56 = vsub.s32 0, %v55
    %v57 = vrot.slane %v35, %v56
    %v74 = vunpack.c.l.b16 %v38
    %v75 = vunpack.c.l.b16 %v39
    %v76 = vunpack.c.l.b16 %v40
    %v77 = vunpack.c.l.b16 %v41
    %v78 = vunpack.c.l.b16 %v42
    %v79 = vunpack.c.l.b16 %v43
    %v80 = vunpack.c.l.b16 %v44
    %v81 = vunpack.c.l.b16 %v45
    %v82 = vunpack.c.l.b16 %v46
    %v83 = vunpack.c.l.b16 %v47
    %v84 = vunpack.c.l.b16 %v48
    %v85 = vunpack.c.l.b16 %v49
    %v86 = vunpack.c.l.b16 %v50
    %v87 = vunpack.c.l.b16 %v51
    %v88 = vunpack.c.l.b16 %v52
    %v89 = vunpack.c.l.b16 %v53
    %v90 = vpack.c.b16 %v75, %v74
    %v91 = vpack.c.b16 %v77, %v76
    %v92 = vpack.c.b16 %v79, %v78
    %v93 = vpack.c.b16 %v81, %v80
    %v94 = vpack.c.b16 %v83, %v82
    %v95 = vpack.c.b16 %v85, %v84
    %v96 = vpack.c.b16 %v87, %v86
    %v97 = vpack.c.b16 %v89, %v88
    %106 = vmatprep.subr.bf16.mxu0 0
    %107 = vmatpush1.bf16.msra.mxu0 %v97
    %108 = vmatprep.subr.bf16.mxu0 0
    %109 = vmatpush1.bf16.msra.mxu0 %v96
    %110 = vmatprep.subr.bf16.mxu0 0
    %111 = vmatpush1.bf16.msra.mxu0 %v95
    %112 = vmatprep.subr.bf16.mxu0 0
    %113 = vmatpush1.bf16.msra.mxu0 %v94
    %114 = vmatprep.subr.bf16.mxu0 0
    %115 = vmatpush1.bf16.msra.mxu0 %v93
    %116 = vmatprep.subr.bf16.mxu0 0
    %117 = vmatpush1.bf16.msra.mxu0 %v92
    %118 = vmatprep.subr.bf16.mxu0 0
    %119 = vmatpush1.bf16.msra.mxu0 %v91
    %120 = vmatprep.subr.bf16.mxu0 0
    %121 = vmatpush1.bf16.msra.mxu0 %v90
    %122 = vmatprep.subr.bf16.mxu0 0
    %123 = vmatpush2.bf16.msra.mxu0 0
    %124 = vmatprep.subr.bf16.mxu0 0
    %125 = vmatpush2.bf16.msra.mxu0 0
    %126 = vmatprep.subr.bf16.mxu0 0
    %127 = vmatpush2.bf16.msra.mxu0 0
    %128 = vmatprep.subr.bf16.mxu0 0
    %129 = vmatpush2.bf16.msra.mxu0 0
    %130 = vmatprep.subr.bf16.mxu0 0
    %131 = vmatpush2.bf16.msra.mxu0 0
    %132 = vmatprep.subr.bf16.mxu0 0
    %133 = vmatpush2.bf16.msra.mxu0 0
    %134 = vmatprep.subr.bf16.mxu0 0
    %135 = vmatpush2.bf16.msra.mxu0 0
    %136 = vmatprep.subr.bf16.mxu0 0
    %137 = vmatpush2.bf16.msra.mxu0 0
    %138 = vmatprep.mubr.bf16.mxu0 0
    %139 = vmatmul.mubr.bf16.gmra.mxu0 %v37
    %v140 = vpop.f32.mrf.mxu0
    %v141 = vadd.f32 %v57, %v140
    %v142 = vpop.f32.mrf.mxu0
    %v143 = vpop.f32.mrf.mxu0
    %v144 = vpop.f32.mrf.mxu0
    %145 = vdwg.mxu0
    %vm146 = vcmask 1041408
    %v147 = vsel %vm146, %v141, 0.0
    %148 = vadd.xlane.f32.xlu0 %v147
    %v149 = vpop.xlane.xlu0 %148
    %v150 = vmul.f32 %v141, %v141
    %v151 = vsel %vm146, %v150, 0.0
    %152 = vadd.xlane.f32.xlu0 %v151
    %v153 = vpop.xlane.xlu0 %152
    %v154 = vmul.f32 %v149, 0.020833334
    %v155 = vmul.f32 %v153, 0.020833334
    %v156 = vmul.f32 %v154, %v154
    %v157 = vsub.f32 %v155, %v156
    %v158 = vmax.f32 %v157, 0.0
    %v159 = vsub.f32 %v141, %v154
    %v160 = vadd.f32 %v158, 1e-06
    %v161 = vrsqrt.pop %v160
    %v162 = vmul.f32 %v159, %v161
    %v163 = vlaneseq
    %v164 = vshrl.u32 %v163, 7
    %v165 = vsub.s32 1, %v164
    %v166 = vrot.slane %v35, %v165
    %v167 = vmul.f32 %v162, %v166
    %v168 = vlaneseq
    %v169 = vshrl.u32 %v168, 7
    %v170 = vsub.s32 2, %v169
    %v171 = vrot.slane %v35, %v170
    %v172 = vadd.f32 %v167, %v171
    %vm173 = vcmp.ge.f32.partialorder %v172, 0.0
    %v174 = vmul.f32 %v172, 0.01
    %v175 = vsel %vm173, %v172, %v174
    %v176 = vpack.c.bf16 %v175, %v175
    %v177 = vld [vmem:[#allocation2 + $0x4] sm:$0xf]
    %v178 = vld [vmem:[#allocation2 + $0x30] sm:$0xf]
    %v179 = vld [vmem:[#allocation2 + $0x5c] sm:$0xf]
    %v180 = vld [vmem:[#allocation2 + $0x88] sm:$0xf]
    %v181 = vld [vmem:[#allocation2 + $0xb4] sm:$0xf]
    %v182 = vld [vmem:[#allocation2 + $0xe0] sm:$0xf]
    %v183 = vld [vmem:[#allocation2 + $0x10c] sm:$0xf]
    %v184 = vld [vmem:[#allocation2 + $0x138] sm:$0xf]
    %v185 = vld [vmem:[#allocation2 + $0x164] sm:$0xf]
    %v186 = vld [vmem:[#allocation2 + $0x190] sm:$0xf]
    %v187 = vld [vmem:[#allocation2 + $0x1bc] sm:$0xf]
    %v188 = vld [vmem:[#allocation2 + $0x1e8] sm:$0xf]
    %v189 = vld [vmem:[#allocation2 + $0x214] sm:$0xf]
    %v190 = vld [vmem:[#allocation2 + $0x240] sm:$0xf]
    %v191 = vld [vmem:[#allocation2 + $0x26c] sm:$0xf]
    %v192 = vld [vmem:[#allocation2 + $0x298] sm:$0xf]
    %v193 = vlaneseq
    %v194 = vshrl.u32 %v193, 7
    %v195 = vsub.s32 3, %v194
    %v196 = vrot.slane %v35, %v195
    %v213 = vunpack.c.l.b16 %v177
    %v214 = vunpack.c.l.b16 %v178
    %v215 = vunpack.c.l.b16 %v179
    %v216 = vunpack.c.l.b16 %v180
    %v217 = vunpack.c.l.b16 %v181
    %v218 = vunpack.c.l.b16 %v182
    %v219 = vunpack.c.l.b16 %v183
    %v220 = vunpack.c.l.b16 %v184
    %v221 = vunpack.c.l.b16 %v185
    %v222 = vunpack.c.l.b16 %v186
    %v223 = vunpack.c.l.b16 %v187
    %v224 = vunpack.c.l.b16 %v188
    %v225 = vunpack.c.l.b16 %v189
    %v226 = vunpack.c.l.b16 %v190
    %v227 = vunpack.c.l.b16 %v191
    %v228 = vunpack.c.l.b16 %v192
    %v229 = vpack.c.b16 %v214, %v213
    %v230 = vpack.c.b16 %v216, %v215
    %v231 = vpack.c.b16 %v218, %v217
    %v232 = vpack.c.b16 %v220, %v219
    %v233 = vpack.c.b16 %v222, %v221
    %v234 = vpack.c.b16 %v224, %v223
    %v235 = vpack.c.b16 %v226, %v225
    %v236 = vpack.c.b16 %v228, %v227
    %245 = vmatprep.subr.bf16.mxu0 0
    %246 = vmatpush1.bf16.msra.mxu0 %v236
    %247 = vmatprep.subr.bf16.mxu0 0
    %248 = vmatpush1.bf16.msra.mxu0 %v235
    %249 = vmatprep.subr.bf16.mxu0 0
    %250 = vmatpush1.bf16.msra.mxu0 %v234
    %251 = vmatprep.subr.bf16.mxu0 0
    %252 = vmatpush1.bf16.msra.mxu0 %v233
    %253 = vmatprep.subr.bf16.mxu0 0
    %254 = vmatpush1.bf16.msra.mxu0 %v232
    %255 = vmatprep.subr.bf16.mxu0 0
    %256 = vmatpush1.bf16.msra.mxu0 %v231
    %257 = vmatprep.subr.bf16.mxu0 0
    %258 = vmatpush1.bf16.msra.mxu0 %v230
    %259 = vmatprep.subr.bf16.mxu0 0
    %260 = vmatpush1.bf16.msra.mxu0 %v229
    %261 = vmatprep.subr.bf16.mxu0 0
    %262 = vmatpush2.bf16.msra.mxu0 0
    %263 = vmatprep.subr.bf16.mxu0 0
    %264 = vmatpush2.bf16.msra.mxu0 0
    %265 = vmatprep.subr.bf16.mxu0 0
    %266 = vmatpush2.bf16.msra.mxu0 0
    %267 = vmatprep.subr.bf16.mxu0 0
    %268 = vmatpush2.bf16.msra.mxu0 0
    %269 = vmatprep.subr.bf16.mxu0 0
    %270 = vmatpush2.bf16.msra.mxu0 0
    %271 = vmatprep.subr.bf16.mxu0 0
    %272 = vmatpush2.bf16.msra.mxu0 0
    %273 = vmatprep.subr.bf16.mxu0 0
    %274 = vmatpush2.bf16.msra.mxu0 0
    %275 = vmatprep.subr.bf16.mxu0 0
    %276 = vmatpush2.bf16.msra.mxu0 0
    %277 = vmatprep.mubr.bf16.mxu0 0
    %278 = vmatmul.mubr.bf16.gmra.mxu0 %v176
    %v279 = vpop.f32.mrf.mxu0
    %v280 = vadd.f32 %v196, %v279
    %v281 = vpop.f32.mrf.mxu0
    %v282 = vpop.f32.mrf.mxu0
    %v283 = vpop.f32.mrf.mxu0
    %284 = vdwg.mxu0
    %v285 = vsel %vm146, %v280, 0.0
    %286 = vadd.xlane.f32.xlu0 %v285
    %v287 = vpop.xlane.xlu0 %286
    %v288 = vmul.f32 %v280, %v280
    %v289 = vsel %vm146, %v288, 0.0
    %290 = vadd.xlane.f32.xlu0 %v289
    %v291 = vpop.xlane.xlu0 %290
    %v292 = vmul.f32 %v287, 0.020833334
    %v293 = vmul.f32 %v291, 0.020833334
    %v294 = vmul.f32 %v292, %v292
    %v295 = vsub.f32 %v293, %v294
    %v296 = vmax.f32 %v295, 0.0
    %v297 = vsub.f32 %v280, %v292
    %v298 = vadd.f32 %v296, 1e-06
    %v299 = vrsqrt.pop %v298
    %v300 = vmul.f32 %v297, %v299
    %v301 = vlaneseq
    %v302 = vshrl.u32 %v301, 7
    %v303 = vsub.s32 4, %v302
    %v304 = vrot.slane %v35, %v303
    %v305 = vmul.f32 %v300, %v304
    %v306 = vlaneseq
    %v307 = vshrl.u32 %v306, 7
    %v308 = vsub.s32 5, %v307
    %v309 = vrot.slane %v35, %v308
    %v310 = vadd.f32 %v305, %v309
    %v311 = vld [vmem:[%s0] sm:$0xf]
    %v312 = vld [vmem:[%s0 + $0x4] sm:$0xf]
    %v313 = vld [vmem:[%s0 + $0x8] sm:$0xf]
    %v314 = vld [vmem:[%s0 + $0xc] sm:$0xf]
    %v315 = vunpack.c.l.bf16 %v311
    %v316 = vunpack.c.l.bf16 %v312
    %v317 = vunpack.c.l.bf16 %v313
    %v318 = vunpack.c.l.bf16 %v314
    %v319 = vadd.f32 %v315, %v33
    %v320 = vadd.f32 %v316, %v34
    %v321 = vadd.f32 %v317, %v33
    %v322 = vadd.f32 %v318, %v34
    %v323 = vpack.c.bf16 %v320, %v319
    %v324 = vpack.c.bf16 %v322, %v321
    %v325 = vld [vmem:[#allocation2 + $0xc] sm:$0xff]
    %v326 = vld [vmem:[#allocation2 + $0x38] sm:$0xff]
    %v327 = vld [vmem:[#allocation2 + $0x64] sm:$0xff]
    %v328 = vld [vmem:[#allocation2 + $0x90] sm:$0xff]
    %v329 = vld [vmem:[#allocation2 + $0xbc] sm:$0xff]
    %v330 = vld [vmem:[#allocation2 + $0xe8] sm:$0xff]
    %v331 = vld [vmem:[#allocation2 + $0x114] sm:$0xff]
    %v332 = vld [vmem:[#allocation2 + $0x140] sm:$0xff]
    %v333 = vld [vmem:[#allocation2 + $0x16c] sm:$0xff]
    %v334 = vld [vmem:[#allocation2 + $0x198] sm:$0xff]
    %v335 = vld [vmem:[#allocation2 + $0x1c4] sm:$0xff]
    %v336 = vld [vmem:[#allocation2 + $0x1f0] sm:$0xff]
    %v337 = vld [vmem:[#allocation2 + $0x21c] sm:$0xff]
    %v338 = vld [vmem:[#allocation2 + $0x248] sm:$0xff]
    %v339 = vld [vmem:[#allocation2 + $0x274] sm:$0xff]
    %v340 = vld [vmem:[#allocation2 + $0x2a0] sm:$0xff]
    %v357 = vunpack.c.l.b16 %v325
    %v358 = vunpack.c.h.b16 %v325
    %v359 = vunpack.c.l.b16 %v326
    %v360 = vunpack.c.h.b16 %v326
    %v361 = vunpack.c.l.b16 %v327
    %v362 = vunpack.c.h.b16 %v327
    %v363 = vunpack.c.l.b16 %v328
    %v364 = vunpack.c.h.b16 %v328
    %v365 = vunpack.c.l.b16 %v329
    %v366 = vunpack.c.h.b16 %v329
    %v367 = vunpack.c.l.b16 %v330
    %v368 = vunpack.c.h.b16 %v330
    %v369 = vunpack.c.l.b16 %v331
    %v370 = vunpack.c.h.b16 %v331
    %v371 = vunpack.c.l.b16 %v332
    %v372 = vunpack.c.h.b16 %v332
    %v373 = vunpack.c.l.b16 %v333
    %v374 = vunpack.c.h.b16 %v333
    %v375 = vunpack.c.l.b16 %v334
    %v376 = vunpack.c.h.b16 %v334
    %v377 = vunpack.c.l.b16 %v335
    %v378 = vunpack.c.h.b16 %v335
    %v379 = vunpack.c.l.b16 %v336
    %v380 = vunpack.c.h.b16 %v336
    %v381 = vunpack.c.l.b16 %v337
    %v382 = vunpack.c.h.b16 %v337
    %v383 = vunpack.c.l.b16 %v338
    %v384 = vunpack.c.h.b16 %v338
    %v385 = vunpack.c.l.b16 %v339
    %v386 = vunpack.c.h.b16 %v339
    %v387 = vunpack.c.l.b16 %v340
    %v388 = vunpack.c.h.b16 %v340
    %v389 = vpack.c.b16 %v359, %v357
    %v390 = vpack.c.b16 %v360, %v358
    %v391 = vpack.c.b16 %v363, %v361
    %v392 = vpack.c.b16 %v364, %v362
    %v393 = vpack.c.b16 %v367, %v365
    %v394 = vpack.c.b16 %v368, %v366
    %v395 = vpack.c.b16 %v371, %v369
    %v396 = vpack.c.b16 %v372, %v370
    %v397 = vpack.c.b16 %v375, %v373
    %v398 = vpack.c.b16 %v376, %v374
    %v399 = vpack.c.b16 %v379, %v377
    %v400 = vpack.c.b16 %v380, %v378
    %v401 = vpack.c.b16 %v383, %v381
    %v402 = vpack.c.b16 %v384, %v382
    %v403 = vpack.c.b16 %v387, %v385
    %v404 = vpack.c.b16 %v388, %v386
    %421 = vmatprep.subr.bf16.mxu0 %v404
    %422 = vmatpush1.bf16.msra.mxu0 %v403
    %423 = vmatprep.subr.bf16.mxu0 %v402
    %424 = vmatpush1.bf16.msra.mxu0 %v401
    %425 = vmatprep.subr.bf16.mxu0 %v400
    %426 = vmatpush1.bf16.msra.mxu0 %v399
    %427 = vmatprep.subr.bf16.mxu0 %v398
    %428 = vmatpush1.bf16.msra.mxu0 %v397
    %429 = vmatprep.subr.bf16.mxu0 %v396
    %430 = vmatpush1.bf16.msra.mxu0 %v395
    %431 = vmatprep.subr.bf16.mxu0 %v394
    %432 = vmatpush1.bf16.msra.mxu0 %v393
    %433 = vmatprep.subr.bf16.mxu0 %v392
    %434 = vmatpush1.bf16.msra.mxu0 %v391
    %435 = vmatprep.subr.bf16.mxu0 %v390
    %436 = vmatpush1.bf16.msra.mxu0 %v389
    %437 = vmatprep.subr.bf16.mxu0 0
    %438 = vmatpush2.bf16.msra.mxu0 0
    %439 = vmatprep.subr.bf16.mxu0 0
    %440 = vmatpush2.bf16.msra.mxu0 0
    %441 = vmatprep.subr.bf16.mxu0 0
    %442 = vmatpush2.bf16.msra.mxu0 0
    %443 = vmatprep.subr.bf16.mxu0 0
    %444 = vmatpush2.bf16.msra.mxu0 0
    %445 = vmatprep.subr.bf16.mxu0 0
    %446 = vmatpush2.bf16.msra.mxu0 0
    %447 = vmatprep.subr.bf16.mxu0 0
    %448 = vmatpush2.bf16.msra.mxu0 0
    %449 = vmatprep.subr.bf16.mxu0 0
    %450 = vmatpush2.bf16.msra.mxu0 0
    %451 = vmatprep.subr.bf16.mxu0 0
    %452 = vmatpush2.bf16.msra.mxu0 0
    %453 = vmatprep.mubr.bf16.mxu0 0
    %454 = vmatmul.mubr.bf16.gmra.mxu0 %v323
    %v455 = vpop.f32.mrf.mxu0
    %v456 = vadd.f32 0.0, %v455
    %v457 = vpop.f32.mrf.mxu0
    %v458 = vadd.f32 0.0, %v457
    %v459 = vpop.f32.mrf.mxu0
    %v460 = vadd.f32 0.0, %v459
    %v461 = vpop.f32.mrf.mxu0
    %v462 = vadd.f32 0.0, %v461
    %463 = vmatprep.mubr.bf16.mxu0 0
    %464 = vmatmul.mubr.bf16.gmra.mxu0 %v324
    %v465 = vpop.f32.mrf.mxu0
    %v466 = vadd.f32 0.0, %v465
    %v467 = vpop.f32.mrf.mxu0
    %v468 = vadd.f32 0.0, %v467
    %v469 = vpop.f32.mrf.mxu0
    %v470 = vadd.f32 0.0, %v469
    %v471 = vpop.f32.mrf.mxu0
    %v472 = vadd.f32 0.0, %v471
    %473 = vdwg.mxu0
    %v474 = vpack.c.bf16 %v310, %v310
    %v475 = vld [vmem:[#allocation2 + $0x14] sm:$0xff]
    %v476 = vld [vmem:[#allocation2 + $0x40] sm:$0xff]
    %v477 = vld [vmem:[#allocation2 + $0x6c] sm:$0xff]
    %v478 = vld [vmem:[#allocation2 + $0x98] sm:$0xff]
    %v479 = vld [vmem:[#allocation2 + $0xc4] sm:$0xff]
    %v480 = vld [vmem:[#allocation2 + $0xf0] sm:$0xff]
    %v481 = vld [vmem:[#allocation2 + $0x11c] sm:$0xff]
    %v482 = vld [vmem:[#allocation2 + $0x148] sm:$0xff]
    %v483 = vld [vmem:[#allocation2 + $0x174] sm:$0xff]
    %v484 = vld [vmem:[#allocation2 + $0x1a0] sm:$0xff]
    %v485 = vld [vmem:[#allocation2 + $0x1cc] sm:$0xff]
    %v486 = vld [vmem:[#allocation2 + $0x1f8] sm:$0xff]
    %v487 = vld [vmem:[#allocation2 + $0x224] sm:$0xff]
    %v488 = vld [vmem:[#allocation2 + $0x250] sm:$0xff]
    %v489 = vld [vmem:[#allocation2 + $0x27c] sm:$0xff]
    %v490 = vld [vmem:[#allocation2 + $0x2a8] sm:$0xff]
    %v507 = vunpack.c.l.b16 %v475
    %v508 = vunpack.c.h.b16 %v475
    %v509 = vunpack.c.l.b16 %v476
    %v510 = vunpack.c.h.b16 %v476
    %v511 = vunpack.c.l.b16 %v477
    %v512 = vunpack.c.h.b16 %v477
    %v513 = vunpack.c.l.b16 %v478
    %v514 = vunpack.c.h.b16 %v478
    %v515 = vunpack.c.l.b16 %v479
    %v516 = vunpack.c.h.b16 %v479
    %v517 = vunpack.c.l.b16 %v480
    %v518 = vunpack.c.h.b16 %v480
    %v519 = vunpack.c.l.b16 %v481
    %v520 = vunpack.c.h.b16 %v481
    %v521 = vunpack.c.l.b16 %v482
    %v522 = vunpack.c.h.b16 %v482
    %v523 = vunpack.c.l.b16 %v483
    %v524 = vunpack.c.h.b16 %v483
    %v525 = vunpack.c.l.b16 %v484
    %v526 = vunpack.c.h.b16 %v484
    %v527 = vunpack.c.l.b16 %v485
    %v528 = vunpack.c.h.b16 %v485
    %v529 = vunpack.c.l.b16 %v486
    %v530 = vunpack.c.h.b16 %v486
    %v531 = vunpack.c.l.b16 %v487
    %v532 = vunpack.c.h.b16 %v487
    %v533 = vunpack.c.l.b16 %v488
    %v534 = vunpack.c.h.b16 %v488
    %v535 = vunpack.c.l.b16 %v489
    %v536 = vunpack.c.h.b16 %v489
    %v537 = vunpack.c.l.b16 %v490
    %v538 = vunpack.c.h.b16 %v490
    %v539 = vpack.c.b16 %v509, %v507
    %v540 = vpack.c.b16 %v510, %v508
    %v541 = vpack.c.b16 %v513, %v511
    %v542 = vpack.c.b16 %v514, %v512
    %v543 = vpack.c.b16 %v517, %v515
    %v544 = vpack.c.b16 %v518, %v516
    %v545 = vpack.c.b16 %v521, %v519
    %v546 = vpack.c.b16 %v522, %v520
    %v547 = vpack.c.b16 %v525, %v523
    %v548 = vpack.c.b16 %v526, %v524
    %v549 = vpack.c.b16 %v529, %v527
    %v550 = vpack.c.b16 %v530, %v528
    %v551 = vpack.c.b16 %v533, %v531
    %v552 = vpack.c.b16 %v534, %v532
    %v553 = vpack.c.b16 %v537, %v535
    %v554 = vpack.c.b16 %v538, %v536
    %571 = vmatprep.subr.bf16.mxu0 %v554
    %572 = vmatpush1.bf16.msra.mxu0 %v553
    %573 = vmatprep.subr.bf16.mxu0 %v552
    %574 = vmatpush1.bf16.msra.mxu0 %v551
    %575 = vmatprep.subr.bf16.mxu0 %v550
    %576 = vmatpush1.bf16.msra.mxu0 %v549
    %577 = vmatprep.subr.bf16.mxu0 %v548
    %578 = vmatpush1.bf16.msra.mxu0 %v547
    %579 = vmatprep.subr.bf16.mxu0 %v546
    %580 = vmatpush1.bf16.msra.mxu0 %v545
    %581 = vmatprep.subr.bf16.mxu0 %v544
    %582 = vmatpush1.bf16.msra.mxu0 %v543
    %583 = vmatprep.subr.bf16.mxu0 %v542
    %584 = vmatpush1.bf16.msra.mxu0 %v541
    %585 = vmatprep.subr.bf16.mxu0 %v540
    %586 = vmatpush1.bf16.msra.mxu0 %v539
    %587 = vmatprep.subr.bf16.mxu0 0
    %588 = vmatpush2.bf16.msra.mxu0 0
    %589 = vmatprep.subr.bf16.mxu0 0
    %590 = vmatpush2.bf16.msra.mxu0 0
    %591 = vmatprep.subr.bf16.mxu0 0
    %592 = vmatpush2.bf16.msra.mxu0 0
    %593 = vmatprep.subr.bf16.mxu0 0
    %594 = vmatpush2.bf16.msra.mxu0 0
    %595 = vmatprep.subr.bf16.mxu0 0
    %596 = vmatpush2.bf16.msra.mxu0 0
    %597 = vmatprep.subr.bf16.mxu0 0
    %598 = vmatpush2.bf16.msra.mxu0 0
    %599 = vmatprep.subr.bf16.mxu0 0
    %600 = vmatpush2.bf16.msra.mxu0 0
    %601 = vmatprep.subr.bf16.mxu0 0
    %602 = vmatpush2.bf16.msra.mxu0 0
    %603 = vmatprep.mubr.bf16.mxu0 0
    %604 = vmatmul.mubr.bf16.gmra.mxu0 %v474
    %v605 = vpop.f32.mrf.mxu0
    %v606 = vadd.f32 0.0, %v605
    %v607 = vpop.f32.mrf.mxu0
    %v608 = vadd.f32 0.0, %v607
    %v609 = vpop.f32.mrf.mxu0
    %v610 = vpop.f32.mrf.mxu0
    %611 = vdwg.mxu0
    %v614 = vcombine.low %v606, %v608
    %v616 = vunpack.c.l.s4 1966171168
    %v617 = vunpack.c.0.s8 %v616
    %v618 = vlaneseq
    %v619 = vshrl.u32 %v618, 7
    %v620 = vsub.s32 %v617, %v619
    %v621 = vrot.slane %v614, %v620
    %v622 = vcombine.high %v621, %v621
    %v624 = vunpack.c.l.s4 1966171168
    %v625 = vunpack.c.0.s8 %v624
    %v626 = vlaneseq
    %v627 = vshrl.u32 %v626, 7
    %v628 = vsub.s32 %v625, %v627
    %v629 = vrot.slane %v621, %v628
    %v631 = vunpack.c.l.s4 1966171168
    %v632 = vunpack.c.0.s8 %v631
    %v633 = vlaneseq
    %v634 = vshrl.u32 %v633, 7
    %v635 = vsub.s32 %v632, %v634
    %v636 = vrot.slane %v622, %v635
    %v637 = vlaneseq
    %v638 = vshrl.u32 %v637, 7
    %v639 = vsub.s32 0, %v638
    %v640 = vrot.slane %v629, %v639
    %v641 = vlaneseq
    %v642 = vshrl.u32 %v641, 7
    %v643 = vsub.s32 1, %v642
    %v644 = vrot.slane %v629, %v643
    %v645 = vlaneseq
    %v646 = vshrl.u32 %v645, 7
    %v647 = vsub.s32 0, %v646
    %v648 = vrot.slane %v636, %v647
    %v649 = vlaneseq
    %v650 = vshrl.u32 %v649, 7
    %v651 = vsub.s32 1, %v650
    %v652 = vrot.slane %v636, %v651
    %v657 = vadd.f32 %v456, %v640
    %v658 = vadd.f32 %v458, %v644
    %v659 = vadd.f32 %v460, %v640
    %v660 = vadd.f32 %v462, %v644
    %v661 = vadd.f32 %v466, %v648
    %v662 = vadd.f32 %v468, %v652
    %v663 = vadd.f32 %v470, %v648
    %v664 = vadd.f32 %v472, %v652
    %v666 = vrot.slane %v310, 1
    %v669 = vadd.f32 %v319, %v310
    %v670 = vadd.f32 %v321, %v666
    %v671 = vpack.c.bf16 %v669, %v669
    %v672 = vpack.c.bf16 %v670, %v670
    %v673 = vld [vmem:[#allocation2 + $0x8] sm:$0xf]
    %v674 = vld [vmem:[#allocation2 + $0x34] sm:$0xf]
    %v675 = vld [vmem:[#allocation2 + $0x60] sm:$0xf]
    %v676 = vld [vmem:[#allocation2 + $0x8c] sm:$0xf]
    %v677 = vld [vmem:[#allocation2 + $0xb8] sm:$0xf]
    %v678 = vld [vmem:[#allocation2 + $0xe4] sm:$0xf]
    %v679 = vld [vmem:[#allocation2 + $0x110] sm:$0xf]
    %v680 = vld [vmem:[#allocation2 + $0x13c] sm:$0xf]
    %v681 = vld [vmem:[#allocation2 + $0x168] sm:$0xf]
    %v682 = vld [vmem:[#allocation2 + $0x194] sm:$0xf]
    %v683 = vld [vmem:[#allocation2 + $0x1c0] sm:$0xf]
    %v684 = vld [vmem:[#allocation2 + $0x1ec] sm:$0xf]
    %v685 = vld [vmem:[#allocation2 + $0x218] sm:$0xf]
    %v686 = vld [vmem:[#allocation2 + $0x244] sm:$0xf]
    %v687 = vld [vmem:[#allocation2 + $0x270] sm:$0xf]
    %v688 = vld [vmem:[#allocation2 + $0x29c] sm:$0xf]
    %v691 = vunpack.c.l.b16 %v671
    %v692 = vunpack.c.l.b16 %v672
    %v693 = vrot.slane %v692, 7
    %vm694 = vcmask 1041409
    %v695 = vsel %vm694, %v693, %v691
    %v696 = vpack.c.b16 %v695, %v695
    %v714 = vunpack.c.l.b16 %v673
    %v715 = vunpack.c.l.b16 %v674
    %v716 = vunpack.c.l.b16 %v675
    %v717 = vunpack.c.l.b16 %v676
    %v718 = vunpack.c.l.b16 %v677
    %v719 = vunpack.c.l.b16 %v678
    %v720 = vunpack.c.l.b16 %v679
    %v721 = vunpack.c.l.b16 %v680
    %v722 = vunpack.c.l.b16 %v681
    %v723 = vunpack.c.l.b16 %v682
    %v724 = vunpack.c.l.b16 %v683
    %v725 = vunpack.c.l.b16 %v684
    %v726 = vunpack.c.l.b16 %v685
    %v727 = vunpack.c.l.b16 %v686
    %v728 = vunpack.c.l.b16 %v687
    %v729 = vunpack.c.l.b16 %v688
    %v730 = vpack.c.b16 %v715, %v714
    %v731 = vpack.c.b16 %v717, %v716
    %v732 = vpack.c.b16 %v719, %v718
    %v733 = vpack.c.b16 %v721, %v720
    %v734 = vpack.c.b16 %v723, %v722
    %v735 = vpack.c.b16 %v725, %v724
    %v736 = vpack.c.b16 %v727, %v726
    %v737 = vpack.c.b16 %v729, %v728
    %746 = vmatprep.subr.bf16.mxu0 0
    %747 = vmatpush1.bf16.msra.mxu0 %v737
    %748 = vmatprep.subr.bf16.mxu0 0
    %749 = vmatpush1.bf16.msra.mxu0 %v736
    %750 = vmatprep.subr.bf16.mxu0 0
    %751 = vmatpush1.bf16.msra.mxu0 %v735
    %752 = vmatprep.subr.bf16.mxu0 0
    %753 = vmatpush1.bf16.msra.mxu0 %v734
    %754 = vmatprep.subr.bf16.mxu0 0
    %755 = vmatpush1.bf16.msra.mxu0 %v733
    %756 = vmatprep.subr.bf16.mxu0 0
    %757 = vmatpush1.bf16.msra.mxu0 %v732
    %758 = vmatprep.subr.bf16.mxu0 0
    %759 = vmatpush1.bf16.msra.mxu0 %v731
    %760 = vmatprep.subr.bf16.mxu0 0
    %761 = vmatpush1.bf16.msra.mxu0 %v730
    %762 = vmatprep.subr.bf16.mxu0 0
    %763 = vmatpush2.bf16.msra.mxu0 0
    %764 = vmatprep.subr.bf16.mxu0 0
    %765 = vmatpush2.bf16.msra.mxu0 0
    %766 = vmatprep.subr.bf16.mxu0 0
    %767 = vmatpush2.bf16.msra.mxu0 0
    %768 = vmatprep.subr.bf16.mxu0 0
    %769 = vmatpush2.bf16.msra.mxu0 0
    %770 = vmatprep.subr.bf16.mxu0 0
    %771 = vmatpush2.bf16.msra.mxu0 0
    %772 = vmatprep.subr.bf16.mxu0 0
    %773 = vmatpush2.bf16.msra.mxu0 0
    %774 = vmatprep.subr.bf16.mxu0 0
    %775 = vmatpush2.bf16.msra.mxu0 0
    %776 = vmatprep.subr.bf16.mxu0 0
    %777 = vmatpush2.bf16.msra.mxu0 0
    %778 = vmatprep.mubr.bf16.mxu0 0
    %779 = vmatmul.mubr.bf16.gmra.mxu0 %v696
    %v780 = vpop.f32.mrf.mxu0
    %v781 = vadd.f32 0.0, %v780
    %v782 = vpop.f32.mrf.mxu0
    %v783 = vpop.f32.mrf.mxu0
    %v784 = vpop.f32.mrf.mxu0
    %785 = vdwg.mxu0
    %v788 = vunpack.c.l.s4 1966171168
    %v789 = vunpack.c.0.s8 %v788
    %v790 = vlaneseq
    %v791 = vshrl.u32 %v790, 7
    %v792 = vsub.s32 %v789, %v791
    %v793 = vrot.slane %v781, %v792
    %v794 = vcombine.high %v793, %v793
    %v796 = vunpack.c.l.s4 1966171168
    %v797 = vunpack.c.0.s8 %v796
    %v798 = vlaneseq
    %v799 = vshrl.u32 %v798, 7
    %v800 = vsub.s32 %v797, %v799
    %v801 = vrot.slane %v793, %v800
    %v803 = vunpack.c.l.s4 1966171168
    %v804 = vunpack.c.0.s8 %v803
    %v805 = vlaneseq
    %v806 = vshrl.u32 %v805, 7
    %v807 = vsub.s32 %v804, %v806
    %v808 = vrot.slane %v794, %v807
    %v809 = vlaneseq
    %v810 = vshrl.u32 %v809, 7
    %v811 = vsub.s32 0, %v810
    %v812 = vrot.slane %v801, %v811
    %v813 = vlaneseq
    %v814 = vshrl.u32 %v813, 7
    %v815 = vsub.s32 0, %v814
    %v816 = vrot.slane %v808, %v815
    %v819 = vmul.f32 %v812, %v657
    %v820 = vmul.f32 %v812, %v659
    %v821 = vmul.f32 %v816, %v661
    %v822 = vmul.f32 %v816, %v663
    %823 = vadd.xlane.f32.xlu0 %v819
    %v824 = vpop.xlane.xlu0 %823
    %825 = vadd.xlane.f32.xlu0 %v820
    %v826 = vpop.xlane.xlu0 %825
    %827 = vadd.xlane.f32.xlu0 %v821
    %v828 = vpop.xlane.xlu0 %827
    %829 = vadd.xlane.f32.xlu0 %v822
    %v830 = vpop.xlane.xlu0 %829
    %v831 = vmul.f32 %v824, 0.125
    %v832 = vmul.f32 %v826, 0.125
    %v833 = vmul.f32 %v828, 0.125
    %v834 = vmul.f32 %v830, 0.125
    %v839 = vlaneseq
    %v840 = vand.u32 %v839, 127
    %v841 = vlaneseq
    %v842 = vshrl.u32 %v841, 7
    %v843 = vsub.s32 %v840, %v842
    %v844 = vrot.slane %v831, %v843
    %v845 = vadd.s32 %v840, 4294967288
    %v846 = vlaneseq
    %v847 = vshrl.u32 %v846, 7
    %v848 = vsub.s32 %v845, %v847
    %v849 = vrot.slane %v832, %v848
    %vm850 = vcmask 130112
    %v851 = vsel %vm850, %v849, %v844
    %v852 = vlaneseq
    %v853 = vshrl.u32 %v852, 7
    %v854 = vsub.s32 %v840, %v853
    %v855 = vrot.slane %v833, %v854
    %v856 = vlaneseq
    %v857 = vshrl.u32 %v856, 7
    %v858 = vsub.s32 %v845, %v857
    %v859 = vrot.slane %v834, %v858
    %v860 = vsel %vm850, %v859, %v855
    %v861 = vsel %vm694, %v860, %v851
    %vm863 = vcmask 123904
    %v864 = vsel %vm863, %v861, -inf
    %865 = vmax.xlane.f32.xlu0 %v864
    %v866 = vpop.xlane.xlu0 %865
    %v868 = vlaneseq
    %v869 = vshrl.u32 %v868, 7
    %v870 = vsub.s32 0, %v869
    %v871 = vrot.slane %v866, %v870
    %v872 = vlaneseq
    %v873 = vshrl.u32 %v872, 7
    %v874 = vsub.s32 1, %v873
    %v875 = vrot.slane %v866, %v874
    %v878 = vsub.f32 %v831, %v871
    %v879 = vsub.f32 %v832, %v871
    %v880 = vsub.f32 %v833, %v875
    %v881 = vsub.f32 %v834, %v875
    %v882 = vmul.f32 %v878, 1.442695
    %v883 = vpow.pop %v882
    %v884 = vmul.f32 %v879, 1.442695
    %v885 = vpow.pop %v884
    %v886 = vmul.f32 %v880, 1.442695
    %v887 = vpow.pop %v886
    %v888 = vmul.f32 %v881, 1.442695
    %v889 = vpow.pop %v888
    %894 = vset.pattern.permute.xlu0 0
    %895 = vperm.xlu0 %894, %v883
    %v896 = vpop.permute.xlu0 %895
    %897 = vset.pattern.permute.xlu0 0
    %898 = vperm.xlu0 %897, %v885
    %v899 = vpop.permute.xlu0 %898
    %900 = vset.pattern.permute.xlu0 0
    %901 = vperm.xlu0 %900, %v887
    %v902 = vpop.permute.xlu0 %901
    %903 = vset.pattern.permute.xlu0 0
    %904 = vperm.xlu0 %903, %v889
    %v905 = vpop.permute.xlu0 %904
    %v906 = vlaneseq
    %v907 = vshrl.u32 %v906, 7
    %v908 = vsub.s32 %v840, %v907
    %v909 = vrot.slane %v896, %v908
    %v910 = vlaneseq
    %v911 = vshrl.u32 %v910, 7
    %v912 = vsub.s32 %v845, %v911
    %v913 = vrot.slane %v899, %v912
    %v914 = vsel %vm850, %v913, %v909
    %v915 = vlaneseq
    %v916 = vshrl.u32 %v915, 7
    %v917 = vsub.s32 %v840, %v916
    %v918 = vrot.slane %v902, %v917
    %v919 = vlaneseq
    %v920 = vshrl.u32 %v919, 7
    %v921 = vsub.s32 %v845, %v920
    %v922 = vrot.slane %v905, %v921
    %v923 = vsel %vm850, %v922, %v918
    %v924 = vsel %vm694, %v923, %v914
    %v926 = vsel %vm863, %v924, 0.0
    %927 = vadd.xlane.f32.xlu0 %v926
    %v928 = vpop.xlane.xlu0 %927
    %v930 = vlaneseq
    %v931 = vshrl.u32 %v930, 7
    %v932 = vsub.s32 0, %v931
    %v933 = vrot.slane %v928, %v932
    %v934 = vlaneseq
    %v935 = vshrl.u32 %v934, 7
    %v936 = vsub.s32 1, %v935
    %v937 = vrot.slane %v928, %v936
    %v940 = vrcp.pop %v933
    %v941 = vmul.f32 %v883, %v940
    %v942 = vmul.f32 %v885, %v940
    %v943 = vrcp.pop %v937
    %v944 = vmul.f32 %v887, %v943
    %v945 = vmul.f32 %v889, %v943
    %947 = vset.pattern.permute.xlu0 0
    %948 = vperm.xlu0 %947, %v941
    %v949 = vpop.permute.xlu0 %948
    %952 = vset.pattern.permute.xlu0 0
    %953 = vperm.xlu0 %952, %v942
    %v954 = vpop.permute.xlu0 %953
    %957 = vset.pattern.permute.xlu0 0
    %958 = vperm.xlu0 %957, %v944
    %v959 = vpop.permute.xlu0 %958
    %962 = vset.pattern.permute.xlu0 0
    %963 = vperm.xlu0 %962, %v945
    %v964 = vpop.permute.xlu0 %963
    %v966 = vmul.f32 %v949, %v658
    %v967 = vmul.f32 %v954, %v660
    %v968 = vmul.f32 %v959, %v662
    %v969 = vmul.f32 %v964, %v664
    %v970 = vadd.f32 %v966, %v967
    %v971 = vrot.slane %v970, 4
    %v972 = vadd.f32 %v970, %v971
    %v973 = vrot.slane %v972, 2
    %v974 = vadd.f32 %v972, %v973
    %v975 = vrot.slane %v974, 1
    %v976 = vadd.f32 %v974, %v975
    %v977 = vadd.f32 %v968, %v969
    %v978 = vrot.slane %v977, 4
    %v979 = vadd.f32 %v977, %v978
    %v980 = vrot.slane %v979, 2
    %v981 = vadd.f32 %v979, %v980
    %v982 = vrot.slane %v981, 1
    %v983 = vadd.f32 %v981, %v982
    %v984 = vpack.c.bf16 %v976, %v976
    %v985 = vpack.c.bf16 %v983, %v983
    %v986 = vld [vmem:[#allocation2 + $0x1c] sm:$0xf]
    %v987 = vld [vmem:[#allocation2 + $0x48] sm:$0xf]
    %v988 = vld [vmem:[#allocation2 + $0x74] sm:$0xf]
    %v989 = vld [vmem:[#allocation2 + $0xa0] sm:$0xf]
    %v990 = vld [vmem:[#allocation2 + $0xcc] sm:$0xf]
    %v991 = vld [vmem:[#allocation2 + $0xf8] sm:$0xf]
    %v992 = vld [vmem:[#allocation2 + $0x124] sm:$0xf]
    %v993 = vld [vmem:[#allocation2 + $0x150] sm:$0xf]
    %v994 = vld [vmem:[#allocation2 + $0x17c] sm:$0xf]
    %v995 = vld [vmem:[#allocation2 + $0x1a8] sm:$0xf]
    %v996 = vld [vmem:[#allocation2 + $0x1d4] sm:$0xf]
    %v997 = vld [vmem:[#allocation2 + $0x200] sm:$0xf]
    %v998 = vld [vmem:[#allocation2 + $0x22c] sm:$0xf]
    %v999 = vld [vmem:[#allocation2 + $0x258] sm:$0xf]
    %v1000 = vld [vmem:[#allocation2 + $0x284] sm:$0xf]
    %v1001 = vld [vmem:[#allocation2 + $0x2b0] sm:$0xf]
    %v1004 = vunpack.c.l.b16 %v984
    %v1005 = vunpack.c.l.b16 %v985
    %v1006 = vsel %vm694, %v1005, %v1004
    %v1007 = vpack.c.b16 %v1006, %v1006
    %v1025 = vunpack.c.l.b16 %v986
    %v1026 = vunpack.c.l.b16 %v987
    %v1027 = vunpack.c.l.b16 %v988
    %v1028 = vunpack.c.l.b16 %v989
    %v1029 = vunpack.c.l.b16 %v990
    %v1030 = vunpack.c.l.b16 %v991
    %v1031 = vunpack.c.l.b16 %v992
    %v1032 = vunpack.c.l.b16 %v993
    %v1033 = vunpack.c.l.b16 %v994
    %v1034 = vunpack.c.l.b16 %v995
    %v1035 = vunpack.c.l.b16 %v996
    %v1036 = vunpack.c.l.b16 %v997
    %v1037 = vunpack.c.l.b16 %v998
    %v1038 = vunpack.c.l.b16 %v999
    %v1039 = vunpack.c.l.b16 %v1000
    %v1040 = vunpack.c.l.b16 %v1001
    %v1041 = vpack.c.b16 %v1026, %v1025
    %v1042 = vpack.c.b16 %v1028, %v1027
    %v1043 = vpack.c.b16 %v1030, %v1029
    %v1044 = vpack.c.b16 %v1032, %v1031
    %v1045 = vpack.c.b16 %v1034, %v1033
    %v1046 = vpack.c.b16 %v1036, %v1035
    %v1047 = vpack.c.b16 %v1038, %v1037
    %v1048 = vpack.c.b16 %v1040, %v1039
    %1057 = vmatprep.subr.bf16.mxu0 0
    %1058 = vmatpush1.bf16.msra.mxu0 %v1048
    %1059 = vmatprep.subr.bf16.mxu0 0
    %1060 = vmatpush1.bf16.msra.mxu0 %v1047
    %1061 = vmatprep.subr.bf16.mxu0 0
    %1062 = vmatpush1.bf16.msra.mxu0 %v1046
    %1063 = vmatprep.subr.bf16.mxu0 0
    %1064 = vmatpush1.bf16.msra.mxu0 %v1045
    %1065 = vmatprep.subr.bf16.mxu0 0
    %1066 = vmatpush1.bf16.msra.mxu0 %v1044
    %1067 = vmatprep.subr.bf16.mxu0 0
    %1068 = vmatpush1.bf16.msra.mxu0 %v1043
    %1069 = vmatprep.subr.bf16.mxu0 0
    %1070 = vmatpush1.bf16.msra.mxu0 %v1042
    %1071 = vmatprep.subr.bf16.mxu0 0
    %1072 = vmatpush1.bf16.msra.mxu0 %v1041
    %1073 = vmatprep.subr.bf16.mxu0 0
    %1074 = vmatpush2.bf16.msra.mxu0 0
    %1075 = vmatprep.subr.bf16.mxu0 0
    %1076 = vmatpush2.bf16.msra.mxu0 0
    %1077 = vmatprep.subr.bf16.mxu0 0
    %1078 = vmatpush2.bf16.msra.mxu0 0
    %1079 = vmatprep.subr.bf16.mxu0 0
    %1080 = vmatpush2.bf16.msra.mxu0 0
    %1081 = vmatprep.subr.bf16.mxu0 0
    %1082 = vmatpush2.bf16.msra.mxu0 0
    %1083 = vmatprep.subr.bf16.mxu0 0
    %1084 = vmatpush2.bf16.msra.mxu0 0
    %1085 = vmatprep.subr.bf16.mxu0 0
    %1086 = vmatpush2.bf16.msra.mxu0 0
    %1087 = vmatprep.subr.bf16.mxu0 0
    %1088 = vmatpush2.bf16.msra.mxu0 0
    %1089 = vmatprep.mubr.bf16.mxu0 0
    %1090 = vmatmul.mubr.bf16.gmra.mxu0 %v1007
    %v1091 = vpop.f32.mrf.mxu0
    %v1092 = vadd.f32 0.0, %v1091
    %v1093 = vpop.f32.mrf.mxu0
    %v1094 = vpop.f32.mrf.mxu0
    %v1095 = vpop.f32.mrf.mxu0
    %1096 = vdwg.mxu0
    %v1098 = vrot.slane %v1092, 1
    %v1101 = vadd.f32 %v669, %v1092
    %v1102 = vadd.f32 %v670, %v1098
    %v1105 = vrot.slane %v1102, 7
    %v1106 = vsel %vm694, %v1105, %v1101
    %v1108 = vsel %vm146, %v1106, 0.0
    %1109 = vadd.xlane.f32.xlu0 %v1108
    %v1110 = vpop.xlane.xlu0 %1109
    %v1111 = vmul.f32 %v1101, %v1101
    %v1112 = vmul.f32 %v1102, %v1102
    %v1115 = vrot.slane %v1112, 7
    %v1116 = vsel %vm694, %v1115, %v1111
    %v1118 = vsel %vm146, %v1116, 0.0
    %1119 = vadd.xlane.f32.xlu0 %v1118
    %v1120 = vpop.xlane.xlu0 %1119
    %v1121 = vmul.f32 %v1110, 0.015625
    %v1122 = vmul.f32 %v1120, 0.015625
    %v1123 = vmul.f32 %v1121, %v1121
    %v1124 = vsub.f32 %v1122, %v1123
    %v1125 = vmax.f32 %v1124, 0.0
    %v1127 = vrot.slane %v1121, 1
    %v1130 = vsub.f32 %v1101, %v1121
    %v1131 = vsub.f32 %v1102, %v1127
    %v1132 = vadd.f32 %v1125, 1e-05
    %v1133 = vrsqrt.pop %v1132
    %v1135 = vrot.slane %v1133, 1
    %v1138 = vmul.f32 %v1130, %v1133
    %v1139 = vmul.f32 %v1131, %v1135
    %v1140 = vlaneseq
    %v1141 = vshrl.u32 %v1140, 7
    %v1142 = vsub.s32 6, %v1141
    %v1143 = vrot.slane %v35, %v1142
    %v1144 = vmul.f32 %v1138, %v1143
    %v1145 = vmul.f32 %v1139, %v1143
    %v1146 = vlaneseq
    %v1147 = vshrl.u32 %v1146, 7
    %v1148 = vsub.s32 7, %v1147
    %v1149 = vrot.slane %v35, %v1148
    %v1150 = vadd.f32 %v1144, %v1149
    %v1151 = vadd.f32 %v1145, %v1149
    %v1152 = vpack.c.bf16 %v1150, %v1150
    %v1153 = vpack.c.bf16 %v1151, %v1151
    %v1154 = vld [vmem:[#allocation2 + $0x20] sm:$0xf]
    %v1155 = vld [vmem:[#allocation2 + $0x4c] sm:$0xf]
    %v1156 = vld [vmem:[#allocation2 + $0x78] sm:$0xf]
    %v1157 = vld [vmem:[#allocation2 + $0xa4] sm:$0xf]
    %v1158 = vld [vmem:[#allocation2 + $0xd0] sm:$0xf]
    %v1159 = vld [vmem:[#allocation2 + $0xfc] sm:$0xf]
    %v1160 = vld [vmem:[#allocation2 + $0x128] sm:$0xf]
    %v1161 = vld [vmem:[#allocation2 + $0x154] sm:$0xf]
    %v1162 = vld [vmem:[#allocation2 + $0x180] sm:$0xf]
    %v1163 = vld [vmem:[#allocation2 + $0x1ac] sm:$0xf]
    %v1164 = vld [vmem:[#allocation2 + $0x1d8] sm:$0xf]
    %v1165 = vld [vmem:[#allocation2 + $0x204] sm:$0xf]
    %v1166 = vld [vmem:[#allocation2 + $0x230] sm:$0xf]
    %v1167 = vld [vmem:[#allocation2 + $0x25c] sm:$0xf]
    %v1168 = vld [vmem:[#allocation2 + $0x288] sm:$0xf]
    %v1169 = vld [vmem:[#allocation2 + $0x2b4] sm:$0xf]
    %v1170 = vlaneseq
    %v1171 = vshrl.u32 %v1170, 7
    %v1172 = vsub.s32 0, %v1171
    %v1173 = vrot.slane %v36, %v1172
    %v1176 = vunpack.c.l.b16 %v1152
    %v1177 = vunpack.c.l.b16 %v1153
    %v1178 = vrot.slane %v1177, 7
    %v1179 = vsel %vm694, %v1178, %v1176
    %v1180 = vpack.c.b16 %v1179, %v1179
    %v1198 = vunpack.c.l.b16 %v1154
    %v1199 = vunpack.c.l.b16 %v1155
    %v1200 = vunpack.c.l.b16 %v1156
    %v1201 = vunpack.c.l.b16 %v1157
    %v1202 = vunpack.c.l.b16 %v1158
    %v1203 = vunpack.c.l.b16 %v1159
    %v1204 = vunpack.c.l.b16 %v1160
    %v1205 = vunpack.c.l.b16 %v1161
    %v1206 = vunpack.c.l.b16 %v1162
    %v1207 = vunpack.c.l.b16 %v1163
    %v1208 = vunpack.c.l.b16 %v1164
    %v1209 = vunpack.c.l.b16 %v1165
    %v1210 = vunpack.c.l.b16 %v1166
    %v1211 = vunpack.c.l.b16 %v1167
    %v1212 = vunpack.c.l.b16 %v1168
    %v1213 = vunpack.c.l.b16 %v1169
    %v1214 = vpack.c.b16 %v1199, %v1198
    %v1215 = vpack.c.b16 %v1201, %v1200
    %v1216 = vpack.c.b16 %v1203, %v1202
    %v1217 = vpack.c.b16 %v1205, %v1204
    %v1218 = vpack.c.b16 %v1207, %v1206
    %v1219 = vpack.c.b16 %v1209, %v1208
    %v1220 = vpack.c.b16 %v1211, %v1210
    %v1221 = vpack.c.b16 %v1213, %v1212
    %1230 = vmatprep.subr.bf16.mxu0 0
    %1231 = vmatpush1.bf16.msra.mxu0 %v1221
    %1232 = vmatprep.subr.bf16.mxu0 0
    %1233 = vmatpush1.bf16.msra.mxu0 %v1220
    %1234 = vmatprep.subr.bf16.mxu0 0
    %1235 = vmatpush1.bf16.msra.mxu0 %v1219
    %1236 = vmatprep.subr.bf16.mxu0 0
    %1237 = vmatpush1.bf16.msra.mxu0 %v1218
    %1238 = vmatprep.subr.bf16.mxu0 0
    %1239 = vmatpush1.bf16.msra.mxu0 %v1217
    %1240 = vmatprep.subr.bf16.mxu0 0
    %1241 = vmatpush1.bf16.msra.mxu0 %v1216
    %1242 = vmatprep.subr.bf16.mxu0 0
    %1243 = vmatpush1.bf16.msra.mxu0 %v1215
    %1244 = vmatprep.subr.bf16.mxu0 0
    %1245 = vmatpush1.bf16.msra.mxu0 %v1214
    %1246 = vmatprep.subr.bf16.mxu0 0
    %1247 = vmatpush2.bf16.msra.mxu0 0
    %1248 = vmatprep.subr.bf16.mxu0 0
    %1249 = vmatpush2.bf16.msra.mxu0 0
    %1250 = vmatprep.subr.bf16.mxu0 0
    %1251 = vmatpush2.bf16.msra.mxu0 0
    %1252 = vmatprep.subr.bf16.mxu0 0
    %1253 = vmatpush2.bf16.msra.mxu0 0
    %1254 = vmatprep.subr.bf16.mxu0 0
    %1255 = vmatpush2.bf16.msra.mxu0 0
    %1256 = vmatprep.subr.bf16.mxu0 0
    %1257 = vmatpush2.bf16.msra.mxu0 0
    %1258 = vmatprep.subr.bf16.mxu0 0
    %1259 = vmatpush2.bf16.msra.mxu0 0
    %1260 = vmatprep.subr.bf16.mxu0 0
    %1261 = vmatpush2.bf16.msra.mxu0 0
    %1262 = vmatprep.mubr.bf16.mxu0 0
    %1263 = vmatmul.mubr.bf16.gmra.mxu0 %v1180
    %v1264 = vpop.f32.mrf.mxu0
    %v1265 = vadd.f32 %v1173, %v1264
    %v1266 = vpop.f32.mrf.mxu0
    %v1267 = vpop.f32.mrf.mxu0
    %v1268 = vpop.f32.mrf.mxu0
    %1269 = vdwg.mxu0
    %vm1270 = vcmp.ge.f32.partialorder %v1265, 0.0
    %v1271 = vmul.f32 %v1265, 0.01
    %v1272 = vsel %vm1270, %v1265, %v1271
    %v1273 = vpack.c.bf16 %v1272, %v1272
    %v1274 = vld [vmem:[#allocation2 + $0x24] sm:$0xf]
    %v1275 = vld [vmem:[#allocation2 + $0x50] sm:$0xf]
    %v1276 = vld [vmem:[#allocation2 + $0x7c] sm:$0xf]
    %v1277 = vld [vmem:[#allocation2 + $0xa8] sm:$0xf]
    %v1278 = vld [vmem:[#allocation2 + $0xd4] sm:$0xf]
    %v1279 = vld [vmem:[#allocation2 + $0x100] sm:$0xf]
    %v1280 = vld [vmem:[#allocation2 + $0x12c] sm:$0xf]
    %v1281 = vld [vmem:[#allocation2 + $0x158] sm:$0xf]
    %v1282 = vld [vmem:[#allocation2 + $0x184] sm:$0xf]
    %v1283 = vld [vmem:[#allocation2 + $0x1b0] sm:$0xf]
    %v1284 = vld [vmem:[#allocation2 + $0x1dc] sm:$0xf]
    %v1285 = vld [vmem:[#allocation2 + $0x208] sm:$0xf]
    %v1286 = vld [vmem:[#allocation2 + $0x234] sm:$0xf]
    %v1287 = vld [vmem:[#allocation2 + $0x260] sm:$0xf]
    %v1288 = vld [vmem:[#allocation2 + $0x28c] sm:$0xf]
    %v1289 = vld [vmem:[#allocation2 + $0x2b8] sm:$0xf]
    %v1290 = vlaneseq
    %v1291 = vshrl.u32 %v1290, 7
    %v1292 = vsub.s32 1, %v1291
    %v1293 = vrot.slane %v36, %v1292
    %v1310 = vunpack.c.l.b16 %v1274
    %v1311 = vunpack.c.l.b16 %v1275
    %v1312 = vunpack.c.l.b16 %v1276
    %v1313 = vunpack.c.l.b16 %v1277
    %v1314 = vunpack.c.l.b16 %v1278
    %v1315 = vunpack.c.l.b16 %v1279
    %v1316 = vunpack.c.l.b16 %v1280
    %v1317 = vunpack.c.l.b16 %v1281
    %v1318 = vunpack.c.l.b16 %v1282
    %v1319 = vunpack.c.l.b16 %v1283
    %v1320 = vunpack.c.l.b16 %v1284
    %v1321 = vunpack.c.l.b16 %v1285
    %v1322 = vunpack.c.l.b16 %v1286
    %v1323 = vunpack.c.l.b16 %v1287
    %v1324 = vunpack.c.l.b16 %v1288
    %v1325 = vunpack.c.l.b16 %v1289
    %v1326 = vpack.c.b16 %v1311, %v1310
    %v1327 = vpack.c.b16 %v1313, %v1312
    %v1328 = vpack.c.b16 %v1315, %v1314
    %v1329 = vpack.c.b16 %v1317, %v1316
    %v1330 = vpack.c.b16 %v1319, %v1318
    %v1331 = vpack.c.b16 %v1321, %v1320
    %v1332 = vpack.c.b16 %v1323, %v1322
    %v1333 = vpack.c.b16 %v1325, %v1324
    %1342 = vmatprep.subr.bf16.mxu0 0
    %1343 = vmatpush1.bf16.msra.mxu0 %v1333
    %1344 = vmatprep.subr.bf16.mxu0 0
    %1345 = vmatpush1.bf16.msra.mxu0 %v1332
    %1346 = vmatprep.subr.bf16.mxu0 0
    %1347 = vmatpush1.bf16.msra.mxu0 %v1331
    %1348 = vmatprep.subr.bf16.mxu0 0
    %1349 = vmatpush1.bf16.msra.mxu0 %v1330
    %1350 = vmatprep.subr.bf16.mxu0 0
    %1351 = vmatpush1.bf16.msra.mxu0 %v1329
    %1352 = vmatprep.subr.bf16.mxu0 0
    %1353 = vmatpush1.bf16.msra.mxu0 %v1328
    %1354 = vmatprep.subr.bf16.mxu0 0
    %1355 = vmatpush1.bf16.msra.mxu0 %v1327
    %1356 = vmatprep.subr.bf16.mxu0 0
    %1357 = vmatpush1.bf16.msra.mxu0 %v1326
    %1358 = vmatprep.subr.bf16.mxu0 0
    %1359 = vmatpush2.bf16.msra.mxu0 0
    %1360 = vmatprep.subr.bf16.mxu0 0
    %1361 = vmatpush2.bf16.msra.mxu0 0
    %1362 = vmatprep.subr.bf16.mxu0 0
    %1363 = vmatpush2.bf16.msra.mxu0 0
    %1364 = vmatprep.subr.bf16.mxu0 0
    %1365 = vmatpush2.bf16.msra.mxu0 0
    %1366 = vmatprep.subr.bf16.mxu0 0
    %1367 = vmatpush2.bf16.msra.mxu0 0
    %1368 = vmatprep.subr.bf16.mxu0 0
    %1369 = vmatpush2.bf16.msra.mxu0 0
    %1370 = vmatprep.subr.bf16.mxu0 0
    %1371 = vmatpush2.bf16.msra.mxu0 0
    %1372 = vmatprep.subr.bf16.mxu0 0
    %1373 = vmatpush2.bf16.msra.mxu0 0
    %1374 = vmatprep.mubr.bf16.mxu0 0
    %1375 = vmatmul.mubr.bf16.gmra.mxu0 %v1273
    %v1376 = vpop.f32.mrf.mxu0
    %v1377 = vadd.f32 %v1293, %v1376
    %v1378 = vpop.f32.mrf.mxu0
    %v1379 = vpop.f32.mrf.mxu0
    %v1380 = vpop.f32.mrf.mxu0
    %1381 = vdwg.mxu0
    %v1383 = vrot.slane %v1377, 1
    %v1386 = vadd.f32 %v1150, %v1377
    %v1387 = vadd.f32 %v1151, %v1383
    %v1390 = vrot.slane %v1387, 7
    %v1391 = vsel %vm694, %v1390, %v1386
    %v1393 = vsel %vm146, %v1391, 0.0
    %1394 = vadd.xlane.f32.xlu0 %v1393
    %v1395 = vpop.xlane.xlu0 %1394
    %v1396 = vmul.f32 %v1386, %v1386
    %v1397 = vmul.f32 %v1387, %v1387
    %v1400 = vrot.slane %v1397, 7
    %v1401 = vsel %vm694, %v1400, %v1396
    %v1403 = vsel %vm146, %v1401, 0.0
    %1404 = vadd.xlane.f32.xlu0 %v1403
    %v1405 = vpop.xlane.xlu0 %1404
    %v1406 = vmul.f32 %v1395, 0.015625
    %v1407 = vmul.f32 %v1405, 0.015625
    %v1408 = vmul.f32 %v1406, %v1406
    %v1409 = vsub.f32 %v1407, %v1408
    %v1410 = vmax.f32 %v1409, 0.0
    %v1412 = vrot.slane %v1406, 1
    %v1415 = vsub.f32 %v1386, %v1406
    %v1416 = vsub.f32 %v1387, %v1412
    %v1417 = vadd.f32 %v1410, 1e-05
    %v1418 = vrsqrt.pop %v1417
    %v1420 = vrot.slane %v1418, 1
    %v1423 = vmul.f32 %v1415, %v1418
    %v1424 = vmul.f32 %v1416, %v1420
    %v1425 = vlaneseq
    %v1426 = vshrl.u32 %v1425, 7
    %v1427 = vsub.s32 2, %v1426
    %v1428 = vrot.slane %v36, %v1427
    %v1429 = vmul.f32 %v1423, %v1428
    %v1430 = vmul.f32 %v1424, %v1428
    %v1431 = vlaneseq
    %v1432 = vshrl.u32 %v1431, 7
    %v1433 = vsub.s32 3, %v1432
    %v1434 = vrot.slane %v36, %v1433
    %v1435 = vadd.f32 %v1429, %v1434
    %v1436 = vadd.f32 %v1430, %v1434
    %v1437 = vpack.c.bf16 %v1435, %v1435
    %v1438 = vpack.c.bf16 %v1436, %v1436
    %v1439 = vld [vmem:[#allocation2 + $0x28] sm:$0xf]
    %v1440 = vld [vmem:[#allocation2 + $0x54] sm:$0xf]
    %v1441 = vld [vmem:[#allocation2 + $0x80] sm:$0xf]
    %v1442 = vld [vmem:[#allocation2 + $0xac] sm:$0xf]
    %v1443 = vld [vmem:[#allocation2 + $0xd8] sm:$0xf]
    %v1444 = vld [vmem:[#allocation2 + $0x104] sm:$0xf]
    %v1445 = vld [vmem:[#allocation2 + $0x130] sm:$0xf]
    %v1446 = vld [vmem:[#allocation2 + $0x15c] sm:$0xf]
    %v1447 = vld [vmem:[#allocation2 + $0x188] sm:$0xf]
    %v1448 = vld [vmem:[#allocation2 + $0x1b4] sm:$0xf]
    %v1449 = vld [vmem:[#allocation2 + $0x1e0] sm:$0xf]
    %v1450 = vld [vmem:[#allocation2 + $0x20c] sm:$0xf]
    %v1451 = vld [vmem:[#allocation2 + $0x238] sm:$0xf]
    %v1452 = vld [vmem:[#allocation2 + $0x264] sm:$0xf]
    %v1453 = vld [vmem:[#allocation2 + $0x290] sm:$0xf]
    %v1454 = vld [vmem:[#allocation2 + $0x2bc] sm:$0xf]
    %v1455 = vlaneseq
    %v1456 = vshrl.u32 %v1455, 7
    %v1457 = vsub.s32 4, %v1456
    %v1458 = vrot.slane %v36, %v1457
    %v1461 = vunpack.c.l.b16 %v1437
    %v1462 = vunpack.c.l.b16 %v1438
    %v1463 = vrot.slane %v1462, 7
    %v1464 = vsel %vm694, %v1463, %v1461
    %v1465 = vpack.c.b16 %v1464, %v1464
    %v1483 = vunpack.c.l.b16 %v1439
    %v1484 = vunpack.c.l.b16 %v1440
    %v1485 = vunpack.c.l.b16 %v1441
    %v1486 = vunpack.c.l.b16 %v1442
    %v1487 = vunpack.c.l.b16 %v1443
    %v1488 = vunpack.c.l.b16 %v1444
    %v1489 = vunpack.c.l.b16 %v1445
    %v1490 = vunpack.c.l.b16 %v1446
    %v1491 = vunpack.c.l.b16 %v1447
    %v1492 = vunpack.c.l.b16 %v1448
    %v1493 = vunpack.c.l.b16 %v1449
    %v1494 = vunpack.c.l.b16 %v1450
    %v1495 = vunpack.c.l.b16 %v1451
    %v1496 = vunpack.c.l.b16 %v1452
    %v1497 = vunpack.c.l.b16 %v1453
    %v1498 = vunpack.c.l.b16 %v1454
    %v1499 = vpack.c.b16 %v1484, %v1483
    %v1500 = vpack.c.b16 %v1486, %v1485
    %v1501 = vpack.c.b16 %v1488, %v1487
    %v1502 = vpack.c.b16 %v1490, %v1489
    %v1503 = vpack.c.b16 %v1492, %v1491
    %v1504 = vpack.c.b16 %v1494, %v1493
    %v1505 = vpack.c.b16 %v1496, %v1495
    %v1506 = vpack.c.b16 %v1498, %v1497
    %1515 = vmatprep.subr.bf16.mxu0 0
    %1516 = vmatpush1.bf16.msra.mxu0 %v1506
    %1517 = vmatprep.subr.bf16.mxu0 0
    %1518 = vmatpush1.bf16.msra.mxu0 %v1505
    %1519 = vmatprep.subr.bf16.mxu0 0
    %1520 = vmatpush1.bf16.msra.mxu0 %v1504
    %1521 = vmatprep.subr.bf16.mxu0 0
    %1522 = vmatpush1.bf16.msra.mxu0 %v1503
    %1523 = vmatprep.subr.bf16.mxu0 0
    %1524 = vmatpush1.bf16.msra.mxu0 %v1502
    %1525 = vmatprep.subr.bf16.mxu0 0
    %1526 = vmatpush1.bf16.msra.mxu0 %v1501
    %1527 = vmatprep.subr.bf16.mxu0 0
    %1528 = vmatpush1.bf16.msra.mxu0 %v1500
    %1529 = vmatprep.subr.bf16.mxu0 0
    %1530 = vmatpush1.bf16.msra.mxu0 %v1499
    %1531 = vmatprep.subr.bf16.mxu0 0
    %1532 = vmatpush2.bf16.msra.mxu0 0
    %1533 = vmatprep.subr.bf16.mxu0 0
    %1534 = vmatpush2.bf16.msra.mxu0 0
    %1535 = vmatprep.subr.bf16.mxu0 0
    %1536 = vmatpush2.bf16.msra.mxu0 0
    %1537 = vmatprep.subr.bf16.mxu0 0
    %1538 = vmatpush2.bf16.msra.mxu0 0
    %1539 = vmatprep.subr.bf16.mxu0 0
    %1540 = vmatpush2.bf16.msra.mxu0 0
    %1541 = vmatprep.subr.bf16.mxu0 0
    %1542 = vmatpush2.bf16.msra.mxu0 0
    %1543 = vmatprep.subr.bf16.mxu0 0
    %1544 = vmatpush2.bf16.msra.mxu0 0
    %1545 = vmatprep.subr.bf16.mxu0 0
    %1546 = vmatpush2.bf16.msra.mxu0 0
    %1547 = vmatprep.mubr.bf16.mxu0 0
    %1548 = vmatmul.mubr.bf16.gmra.mxu0 %v1465
    %v1549 = vpop.f32.mrf.mxu0
    %v1550 = vadd.f32 %v1458, %v1549
    %v1551 = vpop.f32.mrf.mxu0
    %v1552 = vpop.f32.mrf.mxu0
    %v1553 = vpop.f32.mrf.mxu0
    %1554 = vdwg.mxu0
    %1555 = vst [vmem:[#allocation5] sm:$0x3] %v1550
    // Predicated region
    $region22: #{bev_forward.1} parent=1 // pred_check
      _
    $region23: #{bev_forward.1} parent=1 // pred_check_branch
      %1557 = sbr.rel (0) target = $region25
    $region24: #{bev_forward.1} parent=1 // pred_region
      %s1559 = ssub.s32 32, 32
      %1560 = vsyncadd [#allocation4], %s1559
      %s1562 = sshll.u32 [#allocation5], 4
      %s1563 = int_to_ptr.vmem [resolvable:$true] %s1562
      %1565 = dma.vmem_to_hbm [thread:$0]  %s1563, 32, %s4, [#allocation4]
    $region25: #{bev_forward.1} parent=1 // pred_fallthru
      _
    // Predicated region
    $region26: #{bev_forward.1} parent=1 // pred_check
      _
    $region27: #{bev_forward.1} parent=1 // pred_check_branch
      %1567 = sbr.rel (0) target = $region29
    $region28: #{bev_forward.1} parent=1 // pred_region
      %1568 = dma.done [#allocation4], 32
    $region29: #{bev_forward.1} parent=1 // pred_fallthru
      _
    %1569 = vsyncpa [#allocation3], 1
    %1570 = vsyncpa [#allocation4], 1

</llo_original>
